<compile_context>
chip_gen: v6e
topology: v6e:2x2x1
jax: 0.10.0
libtpu: 0.0.40
codegen_flags: <defaults>
</compile_context>

<pallas_src>
import functools
import math

import jax
import jax.numpy as jnp
from jax.experimental import pallas as pl
from jax.experimental.pallas import tpu as pltpu


def _word_mlp_kernel(x_ref, w0_ref, b0_ref, w1_ref, b1_ref, w2_ref, b2_ref,
                     w3_ref, b3_ref, w4_ref, b4_ref, w5_ref, b5_ref, o_ref):
    # x_ref: (TM, IN), w0: (IN, H), w1..w4: (H, H), w5: (H, O), b*: (1, *)
    x = x_ref[...]

    # h = Linear(in_dim, hidden)(x)
    h = jnp.dot(x, w0_ref[...], preferred_element_type=jnp.float32) + b0_ref[...]

    # ResLayer_CPCFG #1: ReLU(Linear(ReLU(Linear(h)))) + h
    r = jnp.maximum(
        jnp.dot(h, w1_ref[...], preferred_element_type=jnp.float32) + b1_ref[...],
        0.0)
    r = jnp.maximum(
        jnp.dot(r, w2_ref[...], preferred_element_type=jnp.float32) + b2_ref[...],
        0.0)
    h = h + r

    # ResLayer_CPCFG #2
    r = jnp.maximum(
        jnp.dot(h, w3_ref[...], preferred_element_type=jnp.float32) + b3_ref[...],
        0.0)
    r = jnp.maximum(
        jnp.dot(r, w4_ref[...], preferred_element_type=jnp.float32) + b4_ref[...],
        0.0)
    h = h + r

    # Final Linear(hidden, out_dim)
    out = jnp.dot(h, w5_ref[...], preferred_element_type=jnp.float32) + b5_ref[...]
    o_ref[...] = out.astype(o_ref.dtype)


def _round_up(v, m):
    return ((v + m - 1) // m) * m


def _pad_to(a, shape):
    pads = [(0, t - s) for s, t in zip(a.shape, shape)]
    if all(p == (0, 0) for p in pads):
        return a
    return jnp.pad(a, pads)


@functools.partial(jax.jit, static_argnames=("block_m",))
def word_mlp(x, params, *, block_m=256):
    """x: (..., in_dim).  params: dict from init_params (weights stored (in, out))."""
    w0, b0 = params["w0"], params["b0"]
    w1, b1 = params["w1"], params["b1"]
    w2, b2 = params["w2"], params["b2"]
    w3, b3 = params["w3"], params["b3"]
    w4, b4 = params["w4"], params["b4"]
    w5, b5 = params["w5"], params["b5"]

    in_dim, hidden = w0.shape
    out_dim = w5.shape[1]

    lead = x.shape[:-1]
    n = math.prod(lead) if lead else 1

    # Lane-dense padding (exact zero padding; semantics unchanged).
    in_pad = _round_up(in_dim, 128)
    h_pad = _round_up(hidden, 128)
    o_pad = _round_up(out_dim, 128)
    num_tiles = pl.cdiv(n, block_m)
    n_pad = num_tiles * block_m

    x2 = _pad_to(x.reshape(n, in_dim), (n_pad, in_pad))
    w0p, b0p = _pad_to(w0, (in_pad, h_pad)), _pad_to(b0, (1, h_pad))
    w1p, b1p = _pad_to(w1, (h_pad, h_pad)), _pad_to(b1, (1, h_pad))
    w2p, b2p = _pad_to(w2, (h_pad, h_pad)), _pad_to(b2, (1, h_pad))
    w3p, b3p = _pad_to(w3, (h_pad, h_pad)), _pad_to(b3, (1, h_pad))
    w4p, b4p = _pad_to(w4, (h_pad, h_pad)), _pad_to(b4, (1, h_pad))
    w5p, b5p = _pad_to(w5, (h_pad, o_pad)), _pad_to(b5, (1, o_pad))

    # VMEM budget: resident weights (x2 for buffering) + double-buffered x/out
    # tiles + intermediate headroom; clamp to 64 MiB (v7x physical VMEM).
    bpe = 4
    weight_bytes = (in_pad * h_pad + 4 * h_pad * h_pad + h_pad * o_pad
                    + 5 * h_pad + o_pad) * bpe
    tile_bytes = 2 * block_m * (in_pad + o_pad) * bpe
    scratch_bytes = 3 * block_m * h_pad * bpe
    vmem_limit = min(64 * 1024 * 1024,
                     max(32 * 1024 * 1024,
                         2 * weight_bytes + tile_bytes + scratch_bytes))

    const = lambda i: (0, 0)
    out2 = pl.pallas_call(
        _word_mlp_kernel,
        out_shape=jax.ShapeDtypeStruct((n_pad, o_pad), x.dtype),
        grid_spec=pltpu.PrefetchScalarGridSpec(
            num_scalar_prefetch=0,
            grid=(num_tiles,),
            in_specs=[
                pl.BlockSpec((block_m, in_pad), lambda i: (i, 0)),  # x tile
                pl.BlockSpec((in_pad, h_pad), const),               # w0
                pl.BlockSpec((1, h_pad), const),                    # b0
                pl.BlockSpec((h_pad, h_pad), const),                # w1
                pl.BlockSpec((1, h_pad), const),                    # b1
                pl.BlockSpec((h_pad, h_pad), const),                # w2
                pl.BlockSpec((1, h_pad), const),                    # b2
                pl.BlockSpec((h_pad, h_pad), const),                # w3
                pl.BlockSpec((1, h_pad), const),                    # b3
                pl.BlockSpec((h_pad, h_pad), const),                # w4
                pl.BlockSpec((1, h_pad), const),                    # b4
                pl.BlockSpec((h_pad, o_pad), const),                # w5
                pl.BlockSpec((1, o_pad), const),                    # b5
            ],
            out_specs=pl.BlockSpec((block_m, o_pad), lambda i: (i, 0)),
        ),
        compiler_params=pltpu.CompilerParams(
            dimension_semantics=("parallel",),
            vmem_limit_bytes=int(vmem_limit)),
    )(x2, w0p, b0p, w1p, b1p, w2p, b2p, w3p, b3p, w4p, b4p, w5p, b5p)

    return out2[:n, :out_dim].reshape(*lead, out_dim)


def init_params(key, in_dim, hidden_dim, out_dim):
    """PyTorch-style init (uniform +-1/sqrt(fan_in)); weights stored (in, out)."""
    ks = jax.random.split(key, 12)

    def lin(kw, kb, fan_in, fan_out):
        bound = 1.0 / math.sqrt(fan_in)
        w = jax.random.uniform(kw, (fan_in, fan_out), jnp.float32, -bound, bound)
        b = jax.random.uniform(kb, (1, fan_out), jnp.float32, -bound, bound)
        return w, b

    w0, b0 = lin(ks[0], ks[1], in_dim, hidden_dim)       # Linear(in, hidden)
    w1, b1 = lin(ks[2], ks[3], hidden_dim, hidden_dim)   # ResLayer 1, linear 1
    w2, b2 = lin(ks[4], ks[5], hidden_dim, hidden_dim)   # ResLayer 1, linear 2
    w3, b3 = lin(ks[6], ks[7], hidden_dim, hidden_dim)   # ResLayer 2, linear 1
    w4, b4 = lin(ks[8], ks[9], hidden_dim, hidden_dim)   # ResLayer 2, linear 2
    w5, b5 = lin(ks[10], ks[11], hidden_dim, out_dim)    # Linear(hidden, out)
    return {"w0": w0, "b0": b0, "w1": w1, "b1": b1, "w2": w2, "b2": b2,
            "w3": w3, "b3": b3, "w4": w4, "b4": b4, "w5": w5, "b5": b5}


def reference(x, params):
    """Plain-JAX reference of WordMLP.forward."""
    h = x @ params["w0"] + params["b0"][0]
    r = jnp.maximum(h @ params["w1"] + params["b1"][0], 0.0)
    r = jnp.maximum(r @ params["w2"] + params["b2"][0], 0.0)
    h = h + r
    r = jnp.maximum(h @ params["w3"] + params["b3"][0], 0.0)
    r = jnp.maximum(r @ params["w4"] + params["b4"][0], 0.0)
    h = h + r
    return h @ params["w5"] + params["b5"][0]


if __name__ == "__main__":
    key = jax.random.PRNGKey(0)
    k_x, k_x2, k_p = jax.random.split(key, 3)

    batch, seq, in_dim, hidden_dim, out_dim = 2, 8, 16, 32, 48
    params = init_params(k_p, in_dim, hidden_dim, out_dim)

    # Small shape consistent with the module.
    x = jax.random.normal(k_x, (batch, seq, in_dim), jnp.float32)
    out = jax.block_until_ready(word_mlp(x, params, block_m=256))
    ref = reference(x.reshape(-1, in_dim), params).reshape(batch, seq, out_dim)
    assert out.shape == (batch, seq, out_dim)
    assert jnp.allclose(out, ref, atol=1e-5, rtol=1e-5), "mismatch vs reference"

    # Non-divisible N exercises the pad/mask path (n=300 -> 2 tiles of 256).
    xb = jax.random.normal(k_x2, (3, 100, in_dim), jnp.float32)
    outb = jax.block_until_ready(word_mlp(xb, params, block_m=256))
    refb = reference(xb.reshape(-1, in_dim), params).reshape(3, 100, out_dim)
    assert jnp.allclose(outb, refb, atol=1e-5, rtol=1e-5), "mismatch (ragged N)"

    print("KERNEL_OK")
</pallas_src>

<mosaic_0001>
module attributes {stable_mosaic.version = 11 : i64} {
  func.func @_word_mlp_kernel(%arg0: i32, %arg1: memref<256x128xf32, #tpu.memory_space<vmem>>, %arg2: memref<128x128xf32, #tpu.memory_space<vmem>>, %arg3: memref<1x128xf32, #tpu.memory_space<vmem>>, %arg4: memref<128x128xf32, #tpu.memory_space<vmem>>, %arg5: memref<1x128xf32, #tpu.memory_space<vmem>>, %arg6: memref<128x128xf32, #tpu.memory_space<vmem>>, %arg7: memref<1x128xf32, #tpu.memory_space<vmem>>, %arg8: memref<128x128xf32, #tpu.memory_space<vmem>>, %arg9: memref<1x128xf32, #tpu.memory_space<vmem>>, %arg10: memref<128x128xf32, #tpu.memory_space<vmem>>, %arg11: memref<1x128xf32, #tpu.memory_space<vmem>>, %arg12: memref<128x128xf32, #tpu.memory_space<vmem>>, %arg13: memref<1x128xf32, #tpu.memory_space<vmem>>, %arg14: memref<256x128xf32, #tpu.memory_space<vmem>>) attributes {dimension_semantics = [#tpu.dimension_semantics<parallel>], iteration_bounds = array<i64: 1>, scalar_prefetch = 0 : i64, scratch_operands = 0 : i64, tpu.core_type = #tpu.core_type<tc>, window_params = [{transform_indices = @transform_0, window_bounds = array<i64: 256, 128>}, {pipeline_mode = #tpu.pipeline_mode<synchronous>, transform_indices = @transform_1, window_bounds = array<i64: 128, 128>}, {pipeline_mode = #tpu.pipeline_mode<synchronous>, transform_indices = @transform_2, window_bounds = array<i64: 1, 128>}, {pipeline_mode = #tpu.pipeline_mode<synchronous>, transform_indices = @transform_3, window_bounds = array<i64: 128, 128>}, {pipeline_mode = #tpu.pipeline_mode<synchronous>, transform_indices = @transform_4, window_bounds = array<i64: 1, 128>}, {pipeline_mode = #tpu.pipeline_mode<synchronous>, transform_indices = @transform_5, window_bounds = array<i64: 128, 128>}, {pipeline_mode = #tpu.pipeline_mode<synchronous>, transform_indices = @transform_6, window_bounds = array<i64: 1, 128>}, {pipeline_mode = #tpu.pipeline_mode<synchronous>, transform_indices = @transform_7, window_bounds = array<i64: 128, 128>}, {pipeline_mode = #tpu.pipeline_mode<synchronous>, transform_indices = @transform_8, window_bounds = array<i64: 1, 128>}, {pipeline_mode = #tpu.pipeline_mode<synchronous>, transform_indices = @transform_9, window_bounds = array<i64: 128, 128>}, {pipeline_mode = #tpu.pipeline_mode<synchronous>, transform_indices = @transform_10, window_bounds = array<i64: 1, 128>}, {pipeline_mode = #tpu.pipeline_mode<synchronous>, transform_indices = @transform_11, window_bounds = array<i64: 128, 128>}, {pipeline_mode = #tpu.pipeline_mode<synchronous>, transform_indices = @transform_12, window_bounds = array<i64: 1, 128>}, {transform_indices = @transform_13, window_bounds = array<i64: 256, 128>}]} {
    %c0 = arith.constant 0 : index
    %c0_0 = arith.constant 0 : index
    %0 = vector.load %arg1[%c0, %c0_0] : memref<256x128xf32, #tpu.memory_space<vmem>>, vector<256x128xf32>
    %c0_1 = arith.constant 0 : index
    %c0_2 = arith.constant 0 : index
    %1 = vector.load %arg2[%c0_1, %c0_2] : memref<128x128xf32, #tpu.memory_space<vmem>>, vector<128x128xf32>
    %cst = arith.constant dense<0.000000e+00> : vector<256x128xf32>
    %2 = tpu.matmul %0, %1, %cst {dimension_numbers = #tpu.dot_dimension_numbers<[1], [0], [0], [1], [0, 0, 1, 1], [], []>} : vector<256x128xf32>, vector<128x128xf32>, vector<256x128xf32> -> vector<256x128xf32>
    %c0_3 = arith.constant 0 : index
    %c0_4 = arith.constant 0 : index
    %3 = vector.load %arg3[%c0_3, %c0_4] : memref<1x128xf32, #tpu.memory_space<vmem>>, vector<1x128xf32>
    %4 = vector.broadcast %3 : vector<1x128xf32> to vector<256x128xf32>
    %5 = arith.addf %2, %4 : vector<256x128xf32>
    %c0_5 = arith.constant 0 : index
    %c0_6 = arith.constant 0 : index
    %6 = vector.load %arg4[%c0_5, %c0_6] : memref<128x128xf32, #tpu.memory_space<vmem>>, vector<128x128xf32>
    %cst_7 = arith.constant dense<0.000000e+00> : vector<256x128xf32>
    %7 = tpu.matmul %5, %6, %cst_7 {dimension_numbers = #tpu.dot_dimension_numbers<[1], [0], [0], [1], [0, 0, 1, 1], [], []>} : vector<256x128xf32>, vector<128x128xf32>, vector<256x128xf32> -> vector<256x128xf32>
    %c0_8 = arith.constant 0 : index
    %c0_9 = arith.constant 0 : index
    %8 = vector.load %arg5[%c0_8, %c0_9] : memref<1x128xf32, #tpu.memory_space<vmem>>, vector<1x128xf32>
    %9 = vector.broadcast %8 : vector<1x128xf32> to vector<256x128xf32>
    %10 = arith.addf %7, %9 : vector<256x128xf32>
    %cst_10 = arith.constant 0.000000e+00 : f32
    %11 = vector.broadcast %cst_10 : f32 to vector<256x128xf32>
    %12 = arith.maximumf %10, %11 : vector<256x128xf32>
    %c0_11 = arith.constant 0 : index
    %c0_12 = arith.constant 0 : index
    %13 = vector.load %arg6[%c0_11, %c0_12] : memref<128x128xf32, #tpu.memory_space<vmem>>, vector<128x128xf32>
    %cst_13 = arith.constant dense<0.000000e+00> : vector<256x128xf32>
    %14 = tpu.matmul %12, %13, %cst_13 {dimension_numbers = #tpu.dot_dimension_numbers<[1], [0], [0], [1], [0, 0, 1, 1], [], []>} : vector<256x128xf32>, vector<128x128xf32>, vector<256x128xf32> -> vector<256x128xf32>
    %c0_14 = arith.constant 0 : index
    %c0_15 = arith.constant 0 : index
    %15 = vector.load %arg7[%c0_14, %c0_15] : memref<1x128xf32, #tpu.memory_space<vmem>>, vector<1x128xf32>
    %16 = vector.broadcast %15 : vector<1x128xf32> to vector<256x128xf32>
    %17 = arith.addf %14, %16 : vector<256x128xf32>
    %cst_16 = arith.constant 0.000000e+00 : f32
    %18 = vector.broadcast %cst_16 : f32 to vector<256x128xf32>
    %19 = arith.maximumf %17, %18 : vector<256x128xf32>
    %20 = arith.addf %5, %19 : vector<256x128xf32>
    %c0_17 = arith.constant 0 : index
    %c0_18 = arith.constant 0 : index
    %21 = vector.load %arg8[%c0_17, %c0_18] : memref<128x128xf32, #tpu.memory_space<vmem>>, vector<128x128xf32>
    %cst_19 = arith.constant dense<0.000000e+00> : vector<256x128xf32>
    %22 = tpu.matmul %20, %21, %cst_19 {dimension_numbers = #tpu.dot_dimension_numbers<[1], [0], [0], [1], [0, 0, 1, 1], [], []>} : vector<256x128xf32>, vector<128x128xf32>, vector<256x128xf32> -> vector<256x128xf32>
    %c0_20 = arith.constant 0 : index
    %c0_21 = arith.constant 0 : index
    %23 = vector.load %arg9[%c0_20, %c0_21] : memref<1x128xf32, #tpu.memory_space<vmem>>, vector<1x128xf32>
    %24 = vector.broadcast %23 : vector<1x128xf32> to vector<256x128xf32>
    %25 = arith.addf %22, %24 : vector<256x128xf32>
    %cst_22 = arith.constant 0.000000e+00 : f32
    %26 = vector.broadcast %cst_22 : f32 to vector<256x128xf32>
    %27 = arith.maximumf %25, %26 : vector<256x128xf32>
    %c0_23 = arith.constant 0 : index
    %c0_24 = arith.constant 0 : index
    %28 = vector.load %arg10[%c0_23, %c0_24] : memref<128x128xf32, #tpu.memory_space<vmem>>, vector<128x128xf32>
    %cst_25 = arith.constant dense<0.000000e+00> : vector<256x128xf32>
    %29 = tpu.matmul %27, %28, %cst_25 {dimension_numbers = #tpu.dot_dimension_numbers<[1], [0], [0], [1], [0, 0, 1, 1], [], []>} : vector<256x128xf32>, vector<128x128xf32>, vector<256x128xf32> -> vector<256x128xf32>
    %c0_26 = arith.constant 0 : index
    %c0_27 = arith.constant 0 : index
    %30 = vector.load %arg11[%c0_26, %c0_27] : memref<1x128xf32, #tpu.memory_space<vmem>>, vector<1x128xf32>
    %31 = vector.broadcast %30 : vector<1x128xf32> to vector<256x128xf32>
    %32 = arith.addf %29, %31 : vector<256x128xf32>
    %cst_28 = arith.constant 0.000000e+00 : f32
    %33 = vector.broadcast %cst_28 : f32 to vector<256x128xf32>
    %34 = arith.maximumf %32, %33 : vector<256x128xf32>
    %35 = arith.addf %20, %34 : vector<256x128xf32>
    %c0_29 = arith.constant 0 : index
    %c0_30 = arith.constant 0 : index
    %36 = vector.load %arg12[%c0_29, %c0_30] : memref<128x128xf32, #tpu.memory_space<vmem>>, vector<128x128xf32>
    %cst_31 = arith.constant dense<0.000000e+00> : vector<256x128xf32>
    %37 = tpu.matmul %35, %36, %cst_31 {dimension_numbers = #tpu.dot_dimension_numbers<[1], [0], [0], [1], [0, 0, 1, 1], [], []>} : vector<256x128xf32>, vector<128x128xf32>, vector<256x128xf32> -> vector<256x128xf32>
    %c0_32 = arith.constant 0 : index
    %c0_33 = arith.constant 0 : index
    %38 = vector.load %arg13[%c0_32, %c0_33] : memref<1x128xf32, #tpu.memory_space<vmem>>, vector<1x128xf32>
    %39 = vector.broadcast %38 : vector<1x128xf32> to vector<256x128xf32>
    %40 = arith.addf %37, %39 : vector<256x128xf32>
    %c0_34 = arith.constant 0 : index
    %c0_35 = arith.constant 0 : index
    %41 = vector.load %arg14[%c0_34, %c0_35] : memref<256x128xf32, #tpu.memory_space<vmem>>, vector<256x128xf32>
    tpu.vector_store %arg14[%c0_34, %c0_35], %40 {strides = array<i32>} : memref<256x128xf32, #tpu.memory_space<vmem>>, vector<256x128xf32>,
    return
  }
  func.func @transform_0(%arg0: i32) -> (i32, i32) {
    %c0_i32 = arith.constant 0 : i32
    %c0_i32_0 = arith.constant 0 : i32
    return %arg0, %c0_i32 : i32, i32
  }
  func.func @transform_1(%arg0: i32) -> (i32, i32) {
    %c0_i32 = arith.constant 0 : i32
    %c0_i32_0 = arith.constant 0 : i32
    %c0_i32_1 = arith.constant 0 : i32
    return %c0_i32, %c0_i32_0 : i32, i32
  }
  func.func @transform_2(%arg0: i32) -> (i32, i32) {
    %c0_i32 = arith.constant 0 : i32
    %c0_i32_0 = arith.constant 0 : i32
    %c0_i32_1 = arith.constant 0 : i32
    return %c0_i32, %c0_i32_0 : i32, i32
  }
  func.func @transform_3(%arg0: i32) -> (i32, i32) {
    %c0_i32 = arith.constant 0 : i32
    %c0_i32_0 = arith.constant 0 : i32
    %c0_i32_1 = arith.constant 0 : i32
    return %c0_i32, %c0_i32_0 : i32, i32
  }
  func.func @transform_4(%arg0: i32) -> (i32, i32) {
    %c0_i32 = arith.constant 0 : i32
    %c0_i32_0 = arith.constant 0 : i32
    %c0_i32_1 = arith.constant 0 : i32
    return %c0_i32, %c0_i32_0 : i32, i32
  }
  func.func @transform_5(%arg0: i32) -> (i32, i32) {
    %c0_i32 = arith.constant 0 : i32
    %c0_i32_0 = arith.constant 0 : i32
    %c0_i32_1 = arith.constant 0 : i32
    return %c0_i32, %c0_i32_0 : i32, i32
  }
  func.func @transform_6(%arg0: i32) -> (i32, i32) {
    %c0_i32 = arith.constant 0 : i32
    %c0_i32_0 = arith.constant 0 : i32
    %c0_i32_1 = arith.constant 0 : i32
    return %c0_i32, %c0_i32_0 : i32, i32
  }
  func.func @transform_7(%arg0: i32) -> (i32, i32) {
    %c0_i32 = arith.constant 0 : i32
    %c0_i32_0 = arith.constant 0 : i32
    %c0_i32_1 = arith.constant 0 : i32
    return %c0_i32, %c0_i32_0 : i32, i32
  }
  func.func @transform_8(%arg0: i32) -> (i32, i32) {
    %c0_i32 = arith.constant 0 : i32
    %c0_i32_0 = arith.constant 0 : i32
    %c0_i32_1 = arith.constant 0 : i32
    return %c0_i32, %c0_i32_0 : i32, i32
  }
  func.func @transform_9(%arg0: i32) -> (i32, i32) {
    %c0_i32 = arith.constant 0 : i32
    %c0_i32_0 = arith.constant 0 : i32
    %c0_i32_1 = arith.constant 0 : i32
    return %c0_i32, %c0_i32_0 : i32, i32
  }
  func.func @transform_10(%arg0: i32) -> (i32, i32) {
    %c0_i32 = arith.constant 0 : i32
    %c0_i32_0 = arith.constant 0 : i32
    %c0_i32_1 = arith.constant 0 : i32
    return %c0_i32, %c0_i32_0 : i32, i32
  }
  func.func @transform_11(%arg0: i32) -> (i32, i32) {
    %c0_i32 = arith.constant 0 : i32
    %c0_i32_0 = arith.constant 0 : i32
    %c0_i32_1 = arith.constant 0 : i32
    return %c0_i32, %c0_i32_0 : i32, i32
  }
  func.func @transform_12(%arg0: i32) -> (i32, i32) {
    %c0_i32 = arith.constant 0 : i32
    %c0_i32_0 = arith.constant 0 : i32
    %c0_i32_1 = arith.constant 0 : i32
    return %c0_i32, %c0_i32_0 : i32, i32
  }
  func.func @transform_13(%arg0: i32) -> (i32, i32) {
    %c0_i32 = arith.constant 0 : i32
    %c0_i32_0 = arith.constant 0 : i32
    return %arg0, %c0_i32 : i32, i32
  }
}

</mosaic_0001>

<llo_original>
// kernel: word_mlp.1
$region0: #{word_mlp.1}
  #allocation0 [shape = 'u32[]', space=smem, size = 0x4, offset = 0x4, fixed_abs, tag = 'smem constant byte address 0x4 - core index']
  #allocation1 [shape = 'u32[144,128]{1,0:T(1,128)}', space=vmem, size = 0x12000, scoped, tag = 'internal scratch']
  %s0 = inlined_call_operand.vmem [shape: f32[256,128], index: 0, kind: input, shape index: {}]
  %s1 = inlined_call_operand.vmem [shape: f32[128,128], index: 1, kind: input, shape index: {}]
  %s2 = inlined_call_operand.vmem [shape: f32[1,128], index: 2, kind: input, shape index: {}]
  %s3 = inlined_call_operand.vmem [shape: f32[128,128], index: 3, kind: input, shape index: {}]
  %s4 = inlined_call_operand.vmem [shape: f32[1,128], index: 4, kind: input, shape index: {}]
  %s5 = inlined_call_operand.vmem [shape: f32[128,128], index: 5, kind: input, shape index: {}]
  %s6 = inlined_call_operand.vmem [shape: f32[1,128], index: 6, kind: input, shape index: {}]
  %s7 = inlined_call_operand.vmem [shape: f32[128,128], index: 7, kind: input, shape index: {}]
  %s8 = inlined_call_operand.vmem [shape: f32[1,128], index: 8, kind: input, shape index: {}]
  %s9 = inlined_call_operand.vmem [shape: f32[128,128], index: 9, kind: input, shape index: {}]
  %s10 = inlined_call_operand.vmem [shape: f32[1,128], index: 10, kind: input, shape index: {}]
  %s11 = inlined_call_operand.vmem [shape: f32[128,128], index: 11, kind: input, shape index: {}]
  %s12 = inlined_call_operand.vmem [shape: f32[1,128], index: 12, kind: input, shape index: {}]
  %s13 = inlined_call_operand.vmem [shape: f32[256,128], index: 13, kind: output, shape index: {}]
  %s14 = sld [smem:[#allocation0]]
  $region62: #{word_mlp.1} parent=0
    _
  %s16 = ssub.s32 1, %s14
  %s17 = scalar_select 0, %s16, %s14
  // Predicated region
  $region2: #{word_mlp.1} parent=0 // pred_check
    _
  $region3: #{word_mlp.1} parent=0 // pred_check_branch
    %19 = sbr.rel (0) target = $region5
  $region4: #{word_mlp.1} parent=0 // pred_region
    _
  $region5: #{word_mlp.1} parent=0 // pred_fallthru
    _
  // Predicated region
  $region6: #{word_mlp.1} parent=0 // pred_check
    _
  $region7: #{word_mlp.1} parent=0 // pred_check_branch
    %21 = sbr.rel (0) target = $region9
  $region8: #{word_mlp.1} parent=0 // pred_region
    _
  $region9: #{word_mlp.1} parent=0 // pred_fallthru
    _
  // Predicated region
  $region10: #{word_mlp.1} parent=0 // pred_check
    _
  $region11: #{word_mlp.1} parent=0 // pred_check_branch
    %23 = sbr.rel (0) target = $region13
  $region12: #{word_mlp.1} parent=0 // pred_region
    _
  $region13: #{word_mlp.1} parent=0 // pred_fallthru
    _
  // Predicated region
  $region14: #{word_mlp.1} parent=0 // pred_check
    _
  $region15: #{word_mlp.1} parent=0 // pred_check_branch
    %25 = sbr.rel (0) target = $region17
  $region16: #{word_mlp.1} parent=0 // pred_region
    _
  $region17: #{word_mlp.1} parent=0 // pred_fallthru
    _
  // Predicated region
  $region18: #{word_mlp.1} parent=0 // pred_check
    _
  $region19: #{word_mlp.1} parent=0 // pred_check_branch
    %27 = sbr.rel (0) target = $region21
  $region20: #{word_mlp.1} parent=0 // pred_region
    _
  $region21: #{word_mlp.1} parent=0 // pred_fallthru
    _
  // Predicated region
  $region22: #{word_mlp.1} parent=0 // pred_check
    _
  $region23: #{word_mlp.1} parent=0 // pred_check_branch
    %29 = sbr.rel (0) target = $region25
  $region24: #{word_mlp.1} parent=0 // pred_region
    _
  $region25: #{word_mlp.1} parent=0 // pred_fallthru
    _
  // Predicated region
  $region26: #{word_mlp.1} parent=0 // pred_check
    _
  $region27: #{word_mlp.1} parent=0 // pred_check_branch
    %31 = sbr.rel (0) target = $region29
  $region28: #{word_mlp.1} parent=0 // pred_region
    _
  $region29: #{word_mlp.1} parent=0 // pred_fallthru
    _
  // Predicated region
  $region30: #{word_mlp.1} parent=0 // pred_check
    _
  $region31: #{word_mlp.1} parent=0 // pred_check_branch
    %33 = sbr.rel (0) target = $region33
  $region32: #{word_mlp.1} parent=0 // pred_region
    _
  $region33: #{word_mlp.1} parent=0 // pred_fallthru
    _
  // Predicated region
  $region34: #{word_mlp.1} parent=0 // pred_check
    _
  $region35: #{word_mlp.1} parent=0 // pred_check_branch
    %35 = sbr.rel (0) target = $region37
  $region36: #{word_mlp.1} parent=0 // pred_region
    _
  $region37: #{word_mlp.1} parent=0 // pred_fallthru
    _
  // Predicated region
  $region38: #{word_mlp.1} parent=0 // pred_check
    _
  $region39: #{word_mlp.1} parent=0 // pred_check_branch
    %37 = sbr.rel (0) target = $region41
  $region40: #{word_mlp.1} parent=0 // pred_region
    _
  $region41: #{word_mlp.1} parent=0 // pred_fallthru
    _
  // Predicated region
  $region42: #{word_mlp.1} parent=0 // pred_check
    _
  $region43: #{word_mlp.1} parent=0 // pred_check_branch
    %39 = sbr.rel (0) target = $region45
  $region44: #{word_mlp.1} parent=0 // pred_region
    _
  $region45: #{word_mlp.1} parent=0 // pred_fallthru
    _
  // Predicated region
  $region46: #{word_mlp.1} parent=0 // pred_check
    _
  $region47: #{word_mlp.1} parent=0 // pred_check_branch
    %41 = sbr.rel (0) target = $region49
  $region48: #{word_mlp.1} parent=0 // pred_region
    _
  $region49: #{word_mlp.1} parent=0 // pred_fallthru
    _
  // Predicated region
  $region50: #{word_mlp.1} parent=0 // pred_check
    _
  $region51: #{word_mlp.1} parent=0 // pred_check_branch
    %43 = sbr.rel (0) target = $region53
  $region52: #{word_mlp.1} parent=0 // pred_region
    _
  $region53: #{word_mlp.1} parent=0 // pred_fallthru
    _
  %v44 = vld [vmem:[%s0] sm:$0xff]
  %v45 = vld [vmem:[%s0 + $0x8] sm:$0xff]
  %v46 = vld [vmem:[%s0 + $0x10] sm:$0xff]
  %v47 = vld [vmem:[%s0 + $0x18] sm:$0xff]
  %v48 = vld [vmem:[%s0 + $0x20] sm:$0xff]
  %v49 = vld [vmem:[%s0 + $0x28] sm:$0xff]
  %v50 = vld [vmem:[%s0 + $0x30] sm:$0xff]
  %v51 = vld [vmem:[%s0 + $0x38] sm:$0xff]
  %v52 = vld [vmem:[%s0 + $0x40] sm:$0xff]
  %v53 = vld [vmem:[%s0 + $0x48] sm:$0xff]
  %v54 = vld [vmem:[%s0 + $0x50] sm:$0xff]
  %v55 = vld [vmem:[%s0 + $0x58] sm:$0xff]
  %v56 = vld [vmem:[%s0 + $0x60] sm:$0xff]
  %v57 = vld [vmem:[%s0 + $0x68] sm:$0xff]
  %v58 = vld [vmem:[%s0 + $0x70] sm:$0xff]
  %v59 = vld [vmem:[%s0 + $0x78] sm:$0xff]
  %v60 = vld [vmem:[%s0 + $0x80] sm:$0xff]
  %v61 = vld [vmem:[%s0 + $0x88] sm:$0xff]
  %v62 = vld [vmem:[%s0 + $0x90] sm:$0xff]
  %v63 = vld [vmem:[%s0 + $0x98] sm:$0xff]
  %v64 = vld [vmem:[%s0 + $0xa0] sm:$0xff]
  %v65 = vld [vmem:[%s0 + $0xa8] sm:$0xff]
  %v66 = vld [vmem:[%s0 + $0xb0] sm:$0xff]
  %v67 = vld [vmem:[%s0 + $0xb8] sm:$0xff]
  %v68 = vld [vmem:[%s0 + $0xc0] sm:$0xff]
  %v69 = vld [vmem:[%s0 + $0xc8] sm:$0xff]
  %v70 = vld [vmem:[%s0 + $0xd0] sm:$0xff]
  %v71 = vld [vmem:[%s0 + $0xd8] sm:$0xff]
  %v72 = vld [vmem:[%s0 + $0xe0] sm:$0xff]
  %v73 = vld [vmem:[%s0 + $0xe8] sm:$0xff]
  %v74 = vld [vmem:[%s0 + $0xf0] sm:$0xff]
  %v75 = vld [vmem:[%s0 + $0xf8] sm:$0xff]
  %v76 = vld [vmem:[%s1] sm:$0xff]
  %v77 = vld [vmem:[%s1 + $0x8] sm:$0xff]
  %v78 = vld [vmem:[%s1 + $0x10] sm:$0xff]
  %v79 = vld [vmem:[%s1 + $0x18] sm:$0xff]
  %v80 = vld [vmem:[%s1 + $0x20] sm:$0xff]
  %v81 = vld [vmem:[%s1 + $0x28] sm:$0xff]
  %v82 = vld [vmem:[%s1 + $0x30] sm:$0xff]
  %v83 = vld [vmem:[%s1 + $0x38] sm:$0xff]
  %v84 = vld [vmem:[%s1 + $0x40] sm:$0xff]
  %v85 = vld [vmem:[%s1 + $0x48] sm:$0xff]
  %v86 = vld [vmem:[%s1 + $0x50] sm:$0xff]
  %v87 = vld [vmem:[%s1 + $0x58] sm:$0xff]
  %v88 = vld [vmem:[%s1 + $0x60] sm:$0xff]
  %v89 = vld [vmem:[%s1 + $0x68] sm:$0xff]
  %v90 = vld [vmem:[%s1 + $0x70] sm:$0xff]
  %v91 = vld [vmem:[%s1 + $0x78] sm:$0xff]
  %v92 = vld [vmem:[%s2] sm:$0x1]
  %v94 = vlaneseq
  %v95 = vshrl.u32 %v94, 7
  %v96 = vsub.s32 0, %v95
  %v97 = vrot.slane %v92, %v96
  %99 = vmatprep.subr.mxu0 0.0
  %100 = vmatpush1.msra.mxu0 %v91
  %101 = vmatprep.subr.mxu0 0.0
  %102 = vmatpush1.msra.mxu0 %v90
  %103 = vmatprep.subr.mxu0 0.0
  %104 = vmatpush1.msra.mxu0 %v89
  %105 = vmatprep.subr.mxu0 0.0
  %106 = vmatpush1.msra.mxu0 %v88
  %107 = vmatprep.subr.mxu0 0.0
  %108 = vmatpush1.msra.mxu0 %v87
  %109 = vmatprep.subr.mxu0 0.0
  %110 = vmatpush1.msra.mxu0 %v86
  %111 = vmatprep.subr.mxu0 0.0
  %112 = vmatpush1.msra.mxu0 %v85
  %113 = vmatprep.subr.mxu0 0.0
  %114 = vmatpush1.msra.mxu0 %v84
  %115 = vmatprep.subr.mxu0 0.0
  %116 = vmatpush1.msra.mxu0 %v83
  %117 = vmatprep.subr.mxu0 0.0
  %118 = vmatpush1.msra.mxu0 %v82
  %119 = vmatprep.subr.mxu0 0.0
  %120 = vmatpush1.msra.mxu0 %v81
  %121 = vmatprep.subr.mxu0 0.0
  %122 = vmatpush1.msra.mxu0 %v80
  %123 = vmatprep.subr.mxu0 0.0
  %124 = vmatpush1.msra.mxu0 %v79
  %125 = vmatprep.subr.mxu0 0.0
  %126 = vmatpush1.msra.mxu0 %v78
  %127 = vmatprep.subr.mxu0 0.0
  %128 = vmatpush1.msra.mxu0 %v77
  %129 = vmatprep.subr.mxu0 0.0
  %130 = vmatpush1.msra.mxu0 %v76
  %131 = vmatprep.subr.mxu0 0.0
  %132 = vmatpush2.msra.mxu0 0.0
  %133 = vmatprep.subr.mxu0 0.0
  %134 = vmatpush2.msra.mxu0 0.0
  %135 = vmatprep.subr.mxu0 0.0
  %136 = vmatpush2.msra.mxu0 0.0
  %137 = vmatprep.subr.mxu0 0.0
  %138 = vmatpush2.msra.mxu0 0.0
  %139 = vmatprep.subr.mxu0 0.0
  %140 = vmatpush2.msra.mxu0 0.0
  %141 = vmatprep.subr.mxu0 0.0
  %142 = vmatpush2.msra.mxu0 0.0
  %143 = vmatprep.subr.mxu0 0.0
  %144 = vmatpush2.msra.mxu0 0.0
  %145 = vmatprep.subr.mxu0 0.0
  %146 = vmatpush2.msra.mxu0 0.0
  %147 = vmatprep.subr.mxu0 0.0
  %148 = vmatpush2.msra.mxu0 0.0
  %149 = vmatprep.subr.mxu0 0.0
  %150 = vmatpush2.msra.mxu0 0.0
  %151 = vmatprep.subr.mxu0 0.0
  %152 = vmatpush2.msra.mxu0 0.0
  %153 = vmatprep.subr.mxu0 0.0
  %154 = vmatpush2.msra.mxu0 0.0
  %155 = vmatprep.subr.mxu0 0.0
  %156 = vmatpush2.msra.mxu0 0.0
  %157 = vmatprep.subr.mxu0 0.0
  %158 = vmatpush2.msra.mxu0 0.0
  %159 = vmatprep.subr.mxu0 0.0
  %160 = vmatpush2.msra.mxu0 0.0
  %161 = vmatprep.subr.mxu0 0.0
  %162 = vmatpush2.msra.mxu0 0.0
  %163 = vmatprep.mubr.f32.mxu0 0.0
  %164 = vmatmul.mubr.f32.gmra.mxu0 %v44
  %v165 = vpop.f32.mrf.mxu0
  %v166 = vadd.f32 %v97, %v165
  %v167 = vpop.f32.mrf.mxu0
  %168 = vmatprep.mubr.f32.mxu0 0.0
  %169 = vmatmul.mubr.f32.gmra.mxu0 %v45
  %v170 = vpop.f32.mrf.mxu0
  %v171 = vadd.f32 %v97, %v170
  %v172 = vpop.f32.mrf.mxu0
  %173 = vmatprep.mubr.f32.mxu0 0.0
  %174 = vmatmul.mubr.f32.gmra.mxu0 %v46
  %v175 = vpop.f32.mrf.mxu0
  %v176 = vadd.f32 %v97, %v175
  %v177 = vpop.f32.mrf.mxu0
  %178 = vmatprep.mubr.f32.mxu0 0.0
  %179 = vmatmul.mubr.f32.gmra.mxu0 %v47
  %v180 = vpop.f32.mrf.mxu0
  %v181 = vadd.f32 %v97, %v180
  %v182 = vpop.f32.mrf.mxu0
  %183 = vmatprep.mubr.f32.mxu0 0.0
  %184 = vmatmul.mubr.f32.gmra.mxu0 %v48
  %v185 = vpop.f32.mrf.mxu0
  %v186 = vadd.f32 %v97, %v185
  %v187 = vpop.f32.mrf.mxu0
  %188 = vmatprep.mubr.f32.mxu0 0.0
  %189 = vmatmul.mubr.f32.gmra.mxu0 %v49
  %v190 = vpop.f32.mrf.mxu0
  %v191 = vadd.f32 %v97, %v190
  %v192 = vpop.f32.mrf.mxu0
  %193 = vmatprep.mubr.f32.mxu0 0.0
  %194 = vmatmul.mubr.f32.gmra.mxu0 %v50
  %v195 = vpop.f32.mrf.mxu0
  %v196 = vadd.f32 %v97, %v195
  %v197 = vpop.f32.mrf.mxu0
  %198 = vmatprep.mubr.f32.mxu0 0.0
  %199 = vmatmul.mubr.f32.gmra.mxu0 %v51
  %v200 = vpop.f32.mrf.mxu0
  %v201 = vadd.f32 %v97, %v200
  %v202 = vpop.f32.mrf.mxu0
  %203 = vmatprep.mubr.f32.mxu0 0.0
  %204 = vmatmul.mubr.f32.gmra.mxu0 %v52
  %v205 = vpop.f32.mrf.mxu0
  %v206 = vadd.f32 %v97, %v205
  %v207 = vpop.f32.mrf.mxu0
  %208 = vmatprep.mubr.f32.mxu0 0.0
  %209 = vmatmul.mubr.f32.gmra.mxu0 %v53
  %v210 = vpop.f32.mrf.mxu0
  %v211 = vadd.f32 %v97, %v210
  %v212 = vpop.f32.mrf.mxu0
  %213 = vmatprep.mubr.f32.mxu0 0.0
  %214 = vmatmul.mubr.f32.gmra.mxu0 %v54
  %v215 = vpop.f32.mrf.mxu0
  %v216 = vadd.f32 %v97, %v215
  %v217 = vpop.f32.mrf.mxu0
  %218 = vmatprep.mubr.f32.mxu0 0.0
  %219 = vmatmul.mubr.f32.gmra.mxu0 %v55
  %v220 = vpop.f32.mrf.mxu0
  %v221 = vadd.f32 %v97, %v220
  %v222 = vpop.f32.mrf.mxu0
  %223 = vmatprep.mubr.f32.mxu0 0.0
  %224 = vmatmul.mubr.f32.gmra.mxu0 %v56
  %v225 = vpop.f32.mrf.mxu0
  %v226 = vadd.f32 %v97, %v225
  %v227 = vpop.f32.mrf.mxu0
  %228 = vmatprep.mubr.f32.mxu0 0.0
  %229 = vmatmul.mubr.f32.gmra.mxu0 %v57
  %v230 = vpop.f32.mrf.mxu0
  %v231 = vadd.f32 %v97, %v230
  %v232 = vpop.f32.mrf.mxu0
  %233 = vmatprep.mubr.f32.mxu0 0.0
  %234 = vmatmul.mubr.f32.gmra.mxu0 %v58
  %v235 = vpop.f32.mrf.mxu0
  %v236 = vadd.f32 %v97, %v235
  %v237 = vpop.f32.mrf.mxu0
  %238 = vmatprep.mubr.f32.mxu0 0.0
  %239 = vmatmul.mubr.f32.gmra.mxu0 %v59
  %v240 = vpop.f32.mrf.mxu0
  %v241 = vadd.f32 %v97, %v240
  %v242 = vpop.f32.mrf.mxu0
  %243 = vmatprep.mubr.f32.mxu0 0.0
  %244 = vmatmul.mubr.f32.gmra.mxu0 %v60
  %v245 = vpop.f32.mrf.mxu0
  %v246 = vadd.f32 %v97, %v245
  %v247 = vpop.f32.mrf.mxu0
  %248 = vmatprep.mubr.f32.mxu0 0.0
  %249 = vmatmul.mubr.f32.gmra.mxu0 %v61
  %v250 = vpop.f32.mrf.mxu0
  %v251 = vadd.f32 %v97, %v250
  %v252 = vpop.f32.mrf.mxu0
  %253 = vmatprep.mubr.f32.mxu0 0.0
  %254 = vmatmul.mubr.f32.gmra.mxu0 %v62
  %v255 = vpop.f32.mrf.mxu0
  %v256 = vadd.f32 %v97, %v255
  %v257 = vpop.f32.mrf.mxu0
  %258 = vmatprep.mubr.f32.mxu0 0.0
  %259 = vmatmul.mubr.f32.gmra.mxu0 %v63
  %v260 = vpop.f32.mrf.mxu0
  %v261 = vadd.f32 %v97, %v260
  %v262 = vpop.f32.mrf.mxu0
  %263 = vmatprep.mubr.f32.mxu0 0.0
  %264 = vmatmul.mubr.f32.gmra.mxu0 %v64
  %v265 = vpop.f32.mrf.mxu0
  %v266 = vadd.f32 %v97, %v265
  %v267 = vpop.f32.mrf.mxu0
  %268 = vmatprep.mubr.f32.mxu0 0.0
  %269 = vmatmul.mubr.f32.gmra.mxu0 %v65
  %v270 = vpop.f32.mrf.mxu0
  %v271 = vadd.f32 %v97, %v270
  %v272 = vpop.f32.mrf.mxu0
  %273 = vmatprep.mubr.f32.mxu0 0.0
  %274 = vmatmul.mubr.f32.gmra.mxu0 %v66
  %v275 = vpop.f32.mrf.mxu0
  %v276 = vadd.f32 %v97, %v275
  %v277 = vpop.f32.mrf.mxu0
  %278 = vmatprep.mubr.f32.mxu0 0.0
  %279 = vmatmul.mubr.f32.gmra.mxu0 %v67
  %v280 = vpop.f32.mrf.mxu0
  %v281 = vadd.f32 %v97, %v280
  %v282 = vpop.f32.mrf.mxu0
  %283 = vmatprep.mubr.f32.mxu0 0.0
  %284 = vmatmul.mubr.f32.gmra.mxu0 %v68
  %v285 = vpop.f32.mrf.mxu0
  %v286 = vadd.f32 %v97, %v285
  %v287 = vpop.f32.mrf.mxu0
  %288 = vmatprep.mubr.f32.mxu0 0.0
  %289 = vmatmul.mubr.f32.gmra.mxu0 %v69
  %v290 = vpop.f32.mrf.mxu0
  %v291 = vadd.f32 %v97, %v290
  %v292 = vpop.f32.mrf.mxu0
  %293 = vmatprep.mubr.f32.mxu0 0.0
  %294 = vmatmul.mubr.f32.gmra.mxu0 %v70
  %v295 = vpop.f32.mrf.mxu0
  %v296 = vadd.f32 %v97, %v295
  %v297 = vpop.f32.mrf.mxu0
  %298 = vmatprep.mubr.f32.mxu0 0.0
  %299 = vmatmul.mubr.f32.gmra.mxu0 %v71
  %v300 = vpop.f32.mrf.mxu0
  %v301 = vadd.f32 %v97, %v300
  %v302 = vpop.f32.mrf.mxu0
  %303 = vmatprep.mubr.f32.mxu0 0.0
  %304 = vmatmul.mubr.f32.gmra.mxu0 %v72
  %v305 = vpop.f32.mrf.mxu0
  %v306 = vadd.f32 %v97, %v305
  %v307 = vpop.f32.mrf.mxu0
  %308 = vmatprep.mubr.f32.mxu0 0.0
  %309 = vmatmul.mubr.f32.gmra.mxu0 %v73
  %v310 = vpop.f32.mrf.mxu0
  %v311 = vadd.f32 %v97, %v310
  %v312 = vpop.f32.mrf.mxu0
  %313 = vmatprep.mubr.f32.mxu0 0.0
  %314 = vmatmul.mubr.f32.gmra.mxu0 %v74
  %v315 = vpop.f32.mrf.mxu0
  %v316 = vadd.f32 %v97, %v315
  %v317 = vpop.f32.mrf.mxu0
  %318 = vmatprep.mubr.f32.mxu0 0.0
  %319 = vmatmul.mubr.f32.gmra.mxu0 %v75
  %v320 = vpop.f32.mrf.mxu0
  %v321 = vadd.f32 %v97, %v320
  %v322 = vpop.f32.mrf.mxu0
  %323 = vdwg.mxu0
  %v324 = vld [vmem:[%s3] sm:$0xff]
  %v325 = vld [vmem:[%s3 + $0x8] sm:$0xff]
  %v326 = vld [vmem:[%s3 + $0x10] sm:$0xff]
  %v327 = vld [vmem:[%s3 + $0x18] sm:$0xff]
  %v328 = vld [vmem:[%s3 + $0x20] sm:$0xff]
  %v329 = vld [vmem:[%s3 + $0x28] sm:$0xff]
  %v330 = vld [vmem:[%s3 + $0x30] sm:$0xff]
  %v331 = vld [vmem:[%s3 + $0x38] sm:$0xff]
  %v332 = vld [vmem:[%s3 + $0x40] sm:$0xff]
  %v333 = vld [vmem:[%s3 + $0x48] sm:$0xff]
  %v334 = vld [vmem:[%s3 + $0x50] sm:$0xff]
  %v335 = vld [vmem:[%s3 + $0x58] sm:$0xff]
  %v336 = vld [vmem:[%s3 + $0x60] sm:$0xff]
  %v337 = vld [vmem:[%s3 + $0x68] sm:$0xff]
  %v338 = vld [vmem:[%s3 + $0x70] sm:$0xff]
  %v339 = vld [vmem:[%s3 + $0x78] sm:$0xff]
  %v340 = vld [vmem:[%s4] sm:$0x1]
  %v342 = vlaneseq
  %v343 = vshrl.u32 %v342, 7
  %v344 = vsub.s32 0, %v343
  %v345 = vrot.slane %v340, %v344
  %347 = vmatprep.subr.mxu0 0.0
  %348 = vmatpush1.msra.mxu0 %v339
  %349 = vmatprep.subr.mxu0 0.0
  %350 = vmatpush1.msra.mxu0 %v338
  %351 = vmatprep.subr.mxu0 0.0
  %352 = vmatpush1.msra.mxu0 %v337
  %353 = vmatprep.subr.mxu0 0.0
  %354 = vmatpush1.msra.mxu0 %v336
  %355 = vmatprep.subr.mxu0 0.0
  %356 = vmatpush1.msra.mxu0 %v335
  %357 = vmatprep.subr.mxu0 0.0
  %358 = vmatpush1.msra.mxu0 %v334
  %359 = vmatprep.subr.mxu0 0.0
  %360 = vmatpush1.msra.mxu0 %v333
  %361 = vmatprep.subr.mxu0 0.0
  %362 = vmatpush1.msra.mxu0 %v332
  %363 = vmatprep.subr.mxu0 0.0
  %364 = vmatpush1.msra.mxu0 %v331
  %365 = vmatprep.subr.mxu0 0.0
  %366 = vmatpush1.msra.mxu0 %v330
  %367 = vmatprep.subr.mxu0 0.0
  %368 = vmatpush1.msra.mxu0 %v329
  %369 = vmatprep.subr.mxu0 0.0
  %370 = vmatpush1.msra.mxu0 %v328
  %371 = vmatprep.subr.mxu0 0.0
  %372 = vmatpush1.msra.mxu0 %v327
  %373 = vmatprep.subr.mxu0 0.0
  %374 = vmatpush1.msra.mxu0 %v326
  %375 = vmatprep.subr.mxu0 0.0
  %376 = vmatpush1.msra.mxu0 %v325
  %377 = vmatprep.subr.mxu0 0.0
  %378 = vmatpush1.msra.mxu0 %v324
  %379 = vmatprep.subr.mxu0 0.0
  %380 = vmatpush2.msra.mxu0 0.0
  %381 = vmatprep.subr.mxu0 0.0
  %382 = vmatpush2.msra.mxu0 0.0
  %383 = vmatprep.subr.mxu0 0.0
  %384 = vmatpush2.msra.mxu0 0.0
  %385 = vmatprep.subr.mxu0 0.0
  %386 = vmatpush2.msra.mxu0 0.0
  %387 = vmatprep.subr.mxu0 0.0
  %388 = vmatpush2.msra.mxu0 0.0
  %389 = vmatprep.subr.mxu0 0.0
  %390 = vmatpush2.msra.mxu0 0.0
  %391 = vmatprep.subr.mxu0 0.0
  %392 = vmatpush2.msra.mxu0 0.0
  %393 = vmatprep.subr.mxu0 0.0
  %394 = vmatpush2.msra.mxu0 0.0
  %395 = vmatprep.subr.mxu0 0.0
  %396 = vmatpush2.msra.mxu0 0.0
  %397 = vmatprep.subr.mxu0 0.0
  %398 = vmatpush2.msra.mxu0 0.0
  %399 = vmatprep.subr.mxu0 0.0
  %400 = vmatpush2.msra.mxu0 0.0
  %401 = vmatprep.subr.mxu0 0.0
  %402 = vmatpush2.msra.mxu0 0.0
  %403 = vmatprep.subr.mxu0 0.0
  %404 = vmatpush2.msra.mxu0 0.0
  %405 = vmatprep.subr.mxu0 0.0
  %406 = vmatpush2.msra.mxu0 0.0
  %407 = vmatprep.subr.mxu0 0.0
  %408 = vmatpush2.msra.mxu0 0.0
  %409 = vmatprep.subr.mxu0 0.0
  %410 = vmatpush2.msra.mxu0 0.0
  %411 = vmatprep.mubr.f32.mxu0 0.0
  %412 = vmatmul.mubr.f32.gmra.mxu0 %v166
  %v413 = vpop.f32.mrf.mxu0
  %v414 = vadd.f32 %v345, %v413
  %v415 = vpop.f32.mrf.mxu0
  %416 = vmatprep.mubr.f32.mxu0 0.0
  %417 = vmatmul.mubr.f32.gmra.mxu0 %v171
  %v418 = vpop.f32.mrf.mxu0
  %v419 = vadd.f32 %v345, %v418
  %v420 = vpop.f32.mrf.mxu0
  %421 = vmatprep.mubr.f32.mxu0 0.0
  %422 = vmatmul.mubr.f32.gmra.mxu0 %v176
  %v423 = vpop.f32.mrf.mxu0
  %v424 = vadd.f32 %v345, %v423
  %v425 = vpop.f32.mrf.mxu0
  %426 = vmatprep.mubr.f32.mxu0 0.0
  %427 = vmatmul.mubr.f32.gmra.mxu0 %v181
  %v428 = vpop.f32.mrf.mxu0
  %v429 = vadd.f32 %v345, %v428
  %v430 = vpop.f32.mrf.mxu0
  %431 = vmatprep.mubr.f32.mxu0 0.0
  %432 = vmatmul.mubr.f32.gmra.mxu0 %v186
  %v433 = vpop.f32.mrf.mxu0
  %v434 = vadd.f32 %v345, %v433
  %v435 = vpop.f32.mrf.mxu0
  %436 = vmatprep.mubr.f32.mxu0 0.0
  %437 = vmatmul.mubr.f32.gmra.mxu0 %v191
  %v438 = vpop.f32.mrf.mxu0
  %v439 = vadd.f32 %v345, %v438
  %v440 = vpop.f32.mrf.mxu0
  %441 = vmatprep.mubr.f32.mxu0 0.0
  %442 = vmatmul.mubr.f32.gmra.mxu0 %v196
  %v443 = vpop.f32.mrf.mxu0
  %v444 = vadd.f32 %v345, %v443
  %v445 = vpop.f32.mrf.mxu0
  %446 = vmatprep.mubr.f32.mxu0 0.0
  %447 = vmatmul.mubr.f32.gmra.mxu0 %v201
  %v448 = vpop.f32.mrf.mxu0
  %v449 = vadd.f32 %v345, %v448
  %v450 = vpop.f32.mrf.mxu0
  %451 = vmatprep.mubr.f32.mxu0 0.0
  %452 = vmatmul.mubr.f32.gmra.mxu0 %v206
  %v453 = vpop.f32.mrf.mxu0
  %v454 = vadd.f32 %v345, %v453
  %v455 = vpop.f32.mrf.mxu0
  %456 = vmatprep.mubr.f32.mxu0 0.0
  %457 = vmatmul.mubr.f32.gmra.mxu0 %v211
  %v458 = vpop.f32.mrf.mxu0
  %v459 = vadd.f32 %v345, %v458
  %v460 = vpop.f32.mrf.mxu0
  %461 = vmatprep.mubr.f32.mxu0 0.0
  %462 = vmatmul.mubr.f32.gmra.mxu0 %v216
  %v463 = vpop.f32.mrf.mxu0
  %v464 = vadd.f32 %v345, %v463
  %v465 = vpop.f32.mrf.mxu0
  %466 = vmatprep.mubr.f32.mxu0 0.0
  %467 = vmatmul.mubr.f32.gmra.mxu0 %v221
  %v468 = vpop.f32.mrf.mxu0
  %v469 = vadd.f32 %v345, %v468
  %v470 = vpop.f32.mrf.mxu0
  %471 = vmatprep.mubr.f32.mxu0 0.0
  %472 = vmatmul.mubr.f32.gmra.mxu0 %v226
  %v473 = vpop.f32.mrf.mxu0
  %v474 = vadd.f32 %v345, %v473
  %v475 = vpop.f32.mrf.mxu0
  %476 = vmatprep.mubr.f32.mxu0 0.0
  %477 = vmatmul.mubr.f32.gmra.mxu0 %v231
  %v478 = vpop.f32.mrf.mxu0
  %v479 = vadd.f32 %v345, %v478
  %v480 = vpop.f32.mrf.mxu0
  %481 = vmatprep.mubr.f32.mxu0 0.0
  %482 = vmatmul.mubr.f32.gmra.mxu0 %v236
  %v483 = vpop.f32.mrf.mxu0
  %v484 = vadd.f32 %v345, %v483
  %v485 = vpop.f32.mrf.mxu0
  %486 = vmatprep.mubr.f32.mxu0 0.0
  %487 = vmatmul.mubr.f32.gmra.mxu0 %v241
  %v488 = vpop.f32.mrf.mxu0
  %v489 = vadd.f32 %v345, %v488
  %v490 = vpop.f32.mrf.mxu0
  %491 = vmatprep.mubr.f32.mxu0 0.0
  %492 = vmatmul.mubr.f32.gmra.mxu0 %v246
  %v493 = vpop.f32.mrf.mxu0
  %v494 = vadd.f32 %v345, %v493
  %v495 = vpop.f32.mrf.mxu0
  %496 = vmatprep.mubr.f32.mxu0 0.0
  %497 = vmatmul.mubr.f32.gmra.mxu0 %v251
  %v498 = vpop.f32.mrf.mxu0
  %v499 = vadd.f32 %v345, %v498
  %v500 = vpop.f32.mrf.mxu0
  %501 = vmatprep.mubr.f32.mxu0 0.0
  %502 = vmatmul.mubr.f32.gmra.mxu0 %v256
  %v503 = vpop.f32.mrf.mxu0
  %v504 = vadd.f32 %v345, %v503
  %v505 = vpop.f32.mrf.mxu0
  %506 = vmatprep.mubr.f32.mxu0 0.0
  %507 = vmatmul.mubr.f32.gmra.mxu0 %v261
  %v508 = vpop.f32.mrf.mxu0
  %v509 = vadd.f32 %v345, %v508
  %v510 = vpop.f32.mrf.mxu0
  %511 = vmatprep.mubr.f32.mxu0 0.0
  %512 = vmatmul.mubr.f32.gmra.mxu0 %v266
  %v513 = vpop.f32.mrf.mxu0
  %v514 = vadd.f32 %v345, %v513
  %v515 = vpop.f32.mrf.mxu0
  %516 = vmatprep.mubr.f32.mxu0 0.0
  %517 = vmatmul.mubr.f32.gmra.mxu0 %v271
  %v518 = vpop.f32.mrf.mxu0
  %v519 = vadd.f32 %v345, %v518
  %v520 = vpop.f32.mrf.mxu0
  %521 = vmatprep.mubr.f32.mxu0 0.0
  %522 = vmatmul.mubr.f32.gmra.mxu0 %v276
  %v523 = vpop.f32.mrf.mxu0
  %v524 = vadd.f32 %v345, %v523
  %v525 = vpop.f32.mrf.mxu0
  %526 = vmatprep.mubr.f32.mxu0 0.0
  %527 = vmatmul.mubr.f32.gmra.mxu0 %v281
  %v528 = vpop.f32.mrf.mxu0
  %v529 = vadd.f32 %v345, %v528
  %v530 = vpop.f32.mrf.mxu0
  %531 = vmatprep.mubr.f32.mxu0 0.0
  %532 = vmatmul.mubr.f32.gmra.mxu0 %v286
  %v533 = vpop.f32.mrf.mxu0
  %v534 = vadd.f32 %v345, %v533
  %v535 = vpop.f32.mrf.mxu0
  %536 = vmatprep.mubr.f32.mxu0 0.0
  %537 = vmatmul.mubr.f32.gmra.mxu0 %v291
  %v538 = vpop.f32.mrf.mxu0
  %v539 = vadd.f32 %v345, %v538
  %v540 = vpop.f32.mrf.mxu0
  %541 = vmatprep.mubr.f32.mxu0 0.0
  %542 = vmatmul.mubr.f32.gmra.mxu0 %v296
  %v543 = vpop.f32.mrf.mxu0
  %v544 = vadd.f32 %v345, %v543
  %v545 = vpop.f32.mrf.mxu0
  %546 = vmatprep.mubr.f32.mxu0 0.0
  %547 = vmatmul.mubr.f32.gmra.mxu0 %v301
  %v548 = vpop.f32.mrf.mxu0
  %v549 = vadd.f32 %v345, %v548
  %v550 = vpop.f32.mrf.mxu0
  %551 = vmatprep.mubr.f32.mxu0 0.0
  %552 = vmatmul.mubr.f32.gmra.mxu0 %v306
  %v553 = vpop.f32.mrf.mxu0
  %v554 = vadd.f32 %v345, %v553
  %v555 = vpop.f32.mrf.mxu0
  %556 = vmatprep.mubr.f32.mxu0 0.0
  %557 = vmatmul.mubr.f32.gmra.mxu0 %v311
  %v558 = vpop.f32.mrf.mxu0
  %v559 = vadd.f32 %v345, %v558
  %v560 = vpop.f32.mrf.mxu0
  %561 = vmatprep.mubr.f32.mxu0 0.0
  %562 = vmatmul.mubr.f32.gmra.mxu0 %v316
  %v563 = vpop.f32.mrf.mxu0
  %v564 = vadd.f32 %v345, %v563
  %v565 = vpop.f32.mrf.mxu0
  %566 = vmatprep.mubr.f32.mxu0 0.0
  %567 = vmatmul.mubr.f32.gmra.mxu0 %v321
  %v568 = vpop.f32.mrf.mxu0
  %v569 = vadd.f32 %v345, %v568
  %v570 = vpop.f32.mrf.mxu0
  %571 = vdwg.mxu0
  %v572 = vmax.f32 %v414, 0.0
  %v573 = vmax.f32 %v419, 0.0
  %v574 = vmax.f32 %v424, 0.0
  %v575 = vmax.f32 %v429, 0.0
  %v576 = vmax.f32 %v434, 0.0
  %v577 = vmax.f32 %v439, 0.0
  %v578 = vmax.f32 %v444, 0.0
  %v579 = vmax.f32 %v449, 0.0
  %v580 = vmax.f32 %v454, 0.0
  %v581 = vmax.f32 %v459, 0.0
  %v582 = vmax.f32 %v464, 0.0
  %v583 = vmax.f32 %v469, 0.0
  %v584 = vmax.f32 %v474, 0.0
  %v585 = vmax.f32 %v479, 0.0
  %v586 = vmax.f32 %v484, 0.0
  %v587 = vmax.f32 %v489, 0.0
  %v588 = vmax.f32 %v494, 0.0
  %v589 = vmax.f32 %v499, 0.0
  %v590 = vmax.f32 %v504, 0.0
  %v591 = vmax.f32 %v509, 0.0
  %v592 = vmax.f32 %v514, 0.0
  %v593 = vmax.f32 %v519, 0.0
  %v594 = vmax.f32 %v524, 0.0
  %v595 = vmax.f32 %v529, 0.0
  %v596 = vmax.f32 %v534, 0.0
  %v597 = vmax.f32 %v539, 0.0
  %v598 = vmax.f32 %v544, 0.0
  %v599 = vmax.f32 %v549, 0.0
  %v600 = vmax.f32 %v554, 0.0
  %v601 = vmax.f32 %v559, 0.0
  %v602 = vmax.f32 %v564, 0.0
  %v603 = vmax.f32 %v569, 0.0
  %v604 = vld [vmem:[%s5] sm:$0xff]
  %v605 = vld [vmem:[%s5 + $0x8] sm:$0xff]
  %v606 = vld [vmem:[%s5 + $0x10] sm:$0xff]
  %v607 = vld [vmem:[%s5 + $0x18] sm:$0xff]
  %v608 = vld [vmem:[%s5 + $0x20] sm:$0xff]
  %v609 = vld [vmem:[%s5 + $0x28] sm:$0xff]
  %v610 = vld [vmem:[%s5 + $0x30] sm:$0xff]
  %v611 = vld [vmem:[%s5 + $0x38] sm:$0xff]
  %v612 = vld [vmem:[%s5 + $0x40] sm:$0xff]
  %v613 = vld [vmem:[%s5 + $0x48] sm:$0xff]
  %v614 = vld [vmem:[%s5 + $0x50] sm:$0xff]
  %v615 = vld [vmem:[%s5 + $0x58] sm:$0xff]
  %v616 = vld [vmem:[%s5 + $0x60] sm:$0xff]
  %v617 = vld [vmem:[%s5 + $0x68] sm:$0xff]
  %v618 = vld [vmem:[%s5 + $0x70] sm:$0xff]
  %v619 = vld [vmem:[%s5 + $0x78] sm:$0xff]
  %v620 = vld [vmem:[%s6] sm:$0x1]
  %v622 = vlaneseq
  %v623 = vshrl.u32 %v622, 7
  %v624 = vsub.s32 0, %v623
  %v625 = vrot.slane %v620, %v624
  %627 = vmatprep.subr.mxu0 0.0
  %628 = vmatpush1.msra.mxu0 %v619
  %629 = vmatprep.subr.mxu0 0.0
  %630 = vmatpush1.msra.mxu0 %v618
  %631 = vmatprep.subr.mxu0 0.0
  %632 = vmatpush1.msra.mxu0 %v617
  %633 = vmatprep.subr.mxu0 0.0
  %634 = vmatpush1.msra.mxu0 %v616
  %635 = vmatprep.subr.mxu0 0.0
  %636 = vmatpush1.msra.mxu0 %v615
  %637 = vmatprep.subr.mxu0 0.0
  %638 = vmatpush1.msra.mxu0 %v614
  %639 = vmatprep.subr.mxu0 0.0
  %640 = vmatpush1.msra.mxu0 %v613
  %641 = vmatprep.subr.mxu0 0.0
  %642 = vmatpush1.msra.mxu0 %v612
  %643 = vmatprep.subr.mxu0 0.0
  %644 = vmatpush1.msra.mxu0 %v611
  %645 = vmatprep.subr.mxu0 0.0
  %646 = vmatpush1.msra.mxu0 %v610
  %647 = vmatprep.subr.mxu0 0.0
  %648 = vmatpush1.msra.mxu0 %v609
  %649 = vmatprep.subr.mxu0 0.0
  %650 = vmatpush1.msra.mxu0 %v608
  %651 = vmatprep.subr.mxu0 0.0
  %652 = vmatpush1.msra.mxu0 %v607
  %653 = vmatprep.subr.mxu0 0.0
  %654 = vmatpush1.msra.mxu0 %v606
  %655 = vmatprep.subr.mxu0 0.0
  %656 = vmatpush1.msra.mxu0 %v605
  %657 = vmatprep.subr.mxu0 0.0
  %658 = vmatpush1.msra.mxu0 %v604
  %659 = vmatprep.subr.mxu0 0.0
  %660 = vmatpush2.msra.mxu0 0.0
  %661 = vmatprep.subr.mxu0 0.0
  %662 = vmatpush2.msra.mxu0 0.0
  %663 = vmatprep.subr.mxu0 0.0
  %664 = vmatpush2.msra.mxu0 0.0
  %665 = vmatprep.subr.mxu0 0.0
  %666 = vmatpush2.msra.mxu0 0.0
  %667 = vmatprep.subr.mxu0 0.0
  %668 = vmatpush2.msra.mxu0 0.0
  %669 = vmatprep.subr.mxu0 0.0
  %670 = vmatpush2.msra.mxu0 0.0
  %671 = vmatprep.subr.mxu0 0.0
  %672 = vmatpush2.msra.mxu0 0.0
  %673 = vmatprep.subr.mxu0 0.0
  %674 = vmatpush2.msra.mxu0 0.0
  %675 = vmatprep.subr.mxu0 0.0
  %676 = vmatpush2.msra.mxu0 0.0
  %677 = vmatprep.subr.mxu0 0.0
  %678 = vmatpush2.msra.mxu0 0.0
  %679 = vmatprep.subr.mxu0 0.0
  %680 = vmatpush2.msra.mxu0 0.0
  %681 = vmatprep.subr.mxu0 0.0
  %682 = vmatpush2.msra.mxu0 0.0
  %683 = vmatprep.subr.mxu0 0.0
  %684 = vmatpush2.msra.mxu0 0.0
  %685 = vmatprep.subr.mxu0 0.0
  %686 = vmatpush2.msra.mxu0 0.0
  %687 = vmatprep.subr.mxu0 0.0
  %688 = vmatpush2.msra.mxu0 0.0
  %689 = vmatprep.subr.mxu0 0.0
  %690 = vmatpush2.msra.mxu0 0.0
  %691 = vmatprep.mubr.f32.mxu0 0.0
  %692 = vmatmul.mubr.f32.gmra.mxu0 %v572
  %v693 = vpop.f32.mrf.mxu0
  %v694 = vadd.f32 %v625, %v693
  %v695 = vpop.f32.mrf.mxu0
  %696 = vmatprep.mubr.f32.mxu0 0.0
  %697 = vmatmul.mubr.f32.gmra.mxu0 %v573
  %v698 = vpop.f32.mrf.mxu0
  %v699 = vadd.f32 %v625, %v698
  %v700 = vpop.f32.mrf.mxu0
  %701 = vmatprep.mubr.f32.mxu0 0.0
  %702 = vmatmul.mubr.f32.gmra.mxu0 %v574
  %v703 = vpop.f32.mrf.mxu0
  %v704 = vadd.f32 %v625, %v703
  %v705 = vpop.f32.mrf.mxu0
  %706 = vmatprep.mubr.f32.mxu0 0.0
  %707 = vmatmul.mubr.f32.gmra.mxu0 %v575
  %v708 = vpop.f32.mrf.mxu0
  %v709 = vadd.f32 %v625, %v708
  %v710 = vpop.f32.mrf.mxu0
  %711 = vmatprep.mubr.f32.mxu0 0.0
  %712 = vmatmul.mubr.f32.gmra.mxu0 %v576
  %v713 = vpop.f32.mrf.mxu0
  %v714 = vadd.f32 %v625, %v713
  %v715 = vpop.f32.mrf.mxu0
  %716 = vmatprep.mubr.f32.mxu0 0.0
  %717 = vmatmul.mubr.f32.gmra.mxu0 %v577
  %v718 = vpop.f32.mrf.mxu0
  %v719 = vadd.f32 %v625, %v718
  %v720 = vpop.f32.mrf.mxu0
  %721 = vmatprep.mubr.f32.mxu0 0.0
  %722 = vmatmul.mubr.f32.gmra.mxu0 %v578
  %v723 = vpop.f32.mrf.mxu0
  %v724 = vadd.f32 %v625, %v723
  %v725 = vpop.f32.mrf.mxu0
  %726 = vmatprep.mubr.f32.mxu0 0.0
  %727 = vmatmul.mubr.f32.gmra.mxu0 %v579
  %v728 = vpop.f32.mrf.mxu0
  %v729 = vadd.f32 %v625, %v728
  %v730 = vpop.f32.mrf.mxu0
  %731 = vmatprep.mubr.f32.mxu0 0.0
  %732 = vmatmul.mubr.f32.gmra.mxu0 %v580
  %v733 = vpop.f32.mrf.mxu0
  %v734 = vadd.f32 %v625, %v733
  %v735 = vpop.f32.mrf.mxu0
  %736 = vmatprep.mubr.f32.mxu0 0.0
  %737 = vmatmul.mubr.f32.gmra.mxu0 %v581
  %v738 = vpop.f32.mrf.mxu0
  %v739 = vadd.f32 %v625, %v738
  %v740 = vpop.f32.mrf.mxu0
  %741 = vmatprep.mubr.f32.mxu0 0.0
  %742 = vmatmul.mubr.f32.gmra.mxu0 %v582
  %v743 = vpop.f32.mrf.mxu0
  %v744 = vadd.f32 %v625, %v743
  %v745 = vpop.f32.mrf.mxu0
  %746 = vmatprep.mubr.f32.mxu0 0.0
  %747 = vmatmul.mubr.f32.gmra.mxu0 %v583
  %v748 = vpop.f32.mrf.mxu0
  %v749 = vadd.f32 %v625, %v748
  %v750 = vpop.f32.mrf.mxu0
  %751 = vmatprep.mubr.f32.mxu0 0.0
  %752 = vmatmul.mubr.f32.gmra.mxu0 %v584
  %v753 = vpop.f32.mrf.mxu0
  %v754 = vadd.f32 %v625, %v753
  %v755 = vpop.f32.mrf.mxu0
  %756 = vmatprep.mubr.f32.mxu0 0.0
  %757 = vmatmul.mubr.f32.gmra.mxu0 %v585
  %v758 = vpop.f32.mrf.mxu0
  %v759 = vadd.f32 %v625, %v758
  %v760 = vpop.f32.mrf.mxu0
  %761 = vmatprep.mubr.f32.mxu0 0.0
  %762 = vmatmul.mubr.f32.gmra.mxu0 %v586
  %v763 = vpop.f32.mrf.mxu0
  %v764 = vadd.f32 %v625, %v763
  %v765 = vpop.f32.mrf.mxu0
  %766 = vmatprep.mubr.f32.mxu0 0.0
  %767 = vmatmul.mubr.f32.gmra.mxu0 %v587
  %v768 = vpop.f32.mrf.mxu0
  %v769 = vadd.f32 %v625, %v768
  %v770 = vpop.f32.mrf.mxu0
  %771 = vmatprep.mubr.f32.mxu0 0.0
  %772 = vmatmul.mubr.f32.gmra.mxu0 %v588
  %v773 = vpop.f32.mrf.mxu0
  %v774 = vadd.f32 %v625, %v773
  %v775 = vpop.f32.mrf.mxu0
  %776 = vmatprep.mubr.f32.mxu0 0.0
  %777 = vmatmul.mubr.f32.gmra.mxu0 %v589
  %v778 = vpop.f32.mrf.mxu0
  %v779 = vadd.f32 %v625, %v778
  %v780 = vpop.f32.mrf.mxu0
  %781 = vmatprep.mubr.f32.mxu0 0.0
  %782 = vmatmul.mubr.f32.gmra.mxu0 %v590
  %v783 = vpop.f32.mrf.mxu0
  %v784 = vadd.f32 %v625, %v783
  %v785 = vpop.f32.mrf.mxu0
  %786 = vmatprep.mubr.f32.mxu0 0.0
  %787 = vmatmul.mubr.f32.gmra.mxu0 %v591
  %v788 = vpop.f32.mrf.mxu0
  %v789 = vadd.f32 %v625, %v788
  %v790 = vpop.f32.mrf.mxu0
  %791 = vmatprep.mubr.f32.mxu0 0.0
  %792 = vmatmul.mubr.f32.gmra.mxu0 %v592
  %v793 = vpop.f32.mrf.mxu0
  %v794 = vadd.f32 %v625, %v793
  %v795 = vpop.f32.mrf.mxu0
  %796 = vmatprep.mubr.f32.mxu0 0.0
  %797 = vmatmul.mubr.f32.gmra.mxu0 %v593
  %v798 = vpop.f32.mrf.mxu0
  %v799 = vadd.f32 %v625, %v798
  %v800 = vpop.f32.mrf.mxu0
  %801 = vmatprep.mubr.f32.mxu0 0.0
  %802 = vmatmul.mubr.f32.gmra.mxu0 %v594
  %v803 = vpop.f32.mrf.mxu0
  %v804 = vadd.f32 %v625, %v803
  %v805 = vpop.f32.mrf.mxu0
  %806 = vmatprep.mubr.f32.mxu0 0.0
  %807 = vmatmul.mubr.f32.gmra.mxu0 %v595
  %v808 = vpop.f32.mrf.mxu0
  %v809 = vadd.f32 %v625, %v808
  %v810 = vpop.f32.mrf.mxu0
  %811 = vmatprep.mubr.f32.mxu0 0.0
  %812 = vmatmul.mubr.f32.gmra.mxu0 %v596
  %v813 = vpop.f32.mrf.mxu0
  %v814 = vadd.f32 %v625, %v813
  %v815 = vpop.f32.mrf.mxu0
  %816 = vmatprep.mubr.f32.mxu0 0.0
  %817 = vmatmul.mubr.f32.gmra.mxu0 %v597
  %v818 = vpop.f32.mrf.mxu0
  %v819 = vadd.f32 %v625, %v818
  %v820 = vpop.f32.mrf.mxu0
  %821 = vmatprep.mubr.f32.mxu0 0.0
  %822 = vmatmul.mubr.f32.gmra.mxu0 %v598
  %v823 = vpop.f32.mrf.mxu0
  %v824 = vadd.f32 %v625, %v823
  %v825 = vpop.f32.mrf.mxu0
  %826 = vmatprep.mubr.f32.mxu0 0.0
  %827 = vmatmul.mubr.f32.gmra.mxu0 %v599
  %v828 = vpop.f32.mrf.mxu0
  %v829 = vadd.f32 %v625, %v828
  %v830 = vpop.f32.mrf.mxu0
  %831 = vmatprep.mubr.f32.mxu0 0.0
  %832 = vmatmul.mubr.f32.gmra.mxu0 %v600
  %v833 = vpop.f32.mrf.mxu0
  %v834 = vadd.f32 %v625, %v833
  %v835 = vpop.f32.mrf.mxu0
  %836 = vmatprep.mubr.f32.mxu0 0.0
  %837 = vmatmul.mubr.f32.gmra.mxu0 %v601
  %v838 = vpop.f32.mrf.mxu0
  %v839 = vadd.f32 %v625, %v838
  %v840 = vpop.f32.mrf.mxu0
  %841 = vmatprep.mubr.f32.mxu0 0.0
  %842 = vmatmul.mubr.f32.gmra.mxu0 %v602
  %v843 = vpop.f32.mrf.mxu0
  %v844 = vadd.f32 %v625, %v843
  %v845 = vpop.f32.mrf.mxu0
  %846 = vmatprep.mubr.f32.mxu0 0.0
  %847 = vmatmul.mubr.f32.gmra.mxu0 %v603
  %v848 = vpop.f32.mrf.mxu0
  %v849 = vadd.f32 %v625, %v848
  %v850 = vpop.f32.mrf.mxu0
  %851 = vdwg.mxu0
  %v852 = vmax.f32 %v694, 0.0
  %v853 = vmax.f32 %v699, 0.0
  %v854 = vmax.f32 %v704, 0.0
  %v855 = vmax.f32 %v709, 0.0
  %v856 = vmax.f32 %v714, 0.0
  %v857 = vmax.f32 %v719, 0.0
  %v858 = vmax.f32 %v724, 0.0
  %v859 = vmax.f32 %v729, 0.0
  %v860 = vmax.f32 %v734, 0.0
  %v861 = vmax.f32 %v739, 0.0
  %v862 = vmax.f32 %v744, 0.0
  %v863 = vmax.f32 %v749, 0.0
  %v864 = vmax.f32 %v754, 0.0
  %v865 = vmax.f32 %v759, 0.0
  %v866 = vmax.f32 %v764, 0.0
  %v867 = vmax.f32 %v769, 0.0
  %v868 = vmax.f32 %v774, 0.0
  %v869 = vmax.f32 %v779, 0.0
  %v870 = vmax.f32 %v784, 0.0
  %v871 = vmax.f32 %v789, 0.0
  %v872 = vmax.f32 %v794, 0.0
  %v873 = vmax.f32 %v799, 0.0
  %v874 = vmax.f32 %v804, 0.0
  %v875 = vmax.f32 %v809, 0.0
  %v876 = vmax.f32 %v814, 0.0
  %v877 = vmax.f32 %v819, 0.0
  %v878 = vmax.f32 %v824, 0.0
  %v879 = vmax.f32 %v829, 0.0
  %v880 = vmax.f32 %v834, 0.0
  %v881 = vmax.f32 %v839, 0.0
  %v882 = vmax.f32 %v844, 0.0
  %v883 = vmax.f32 %v849, 0.0
  %v884 = vadd.f32 %v166, %v852
  %v885 = vadd.f32 %v171, %v853
  %v886 = vadd.f32 %v176, %v854
  %v887 = vadd.f32 %v181, %v855
  %v888 = vadd.f32 %v186, %v856
  %v889 = vadd.f32 %v191, %v857
  %v890 = vadd.f32 %v196, %v858
  %v891 = vadd.f32 %v201, %v859
  %v892 = vadd.f32 %v206, %v860
  %v893 = vadd.f32 %v211, %v861
  %v894 = vadd.f32 %v216, %v862
  %v895 = vadd.f32 %v221, %v863
  %v896 = vadd.f32 %v226, %v864
  %v897 = vadd.f32 %v231, %v865
  %v898 = vadd.f32 %v236, %v866
  %v899 = vadd.f32 %v241, %v867
  %v900 = vadd.f32 %v246, %v868
  %v901 = vadd.f32 %v251, %v869
  %v902 = vadd.f32 %v256, %v870
  %v903 = vadd.f32 %v261, %v871
  %v904 = vadd.f32 %v266, %v872
  %v905 = vadd.f32 %v271, %v873
  %v906 = vadd.f32 %v276, %v874
  %v907 = vadd.f32 %v281, %v875
  %v908 = vadd.f32 %v286, %v876
  %v909 = vadd.f32 %v291, %v877
  %v910 = vadd.f32 %v296, %v878
  %v911 = vadd.f32 %v301, %v879
  %v912 = vadd.f32 %v306, %v880
  %v913 = vadd.f32 %v311, %v881
  %v914 = vadd.f32 %v316, %v882
  %v915 = vadd.f32 %v321, %v883
  %v916 = vld [vmem:[%s7] sm:$0xff]
  %v917 = vld [vmem:[%s7 + $0x8] sm:$0xff]
  %v918 = vld [vmem:[%s7 + $0x10] sm:$0xff]
  %v919 = vld [vmem:[%s7 + $0x18] sm:$0xff]
  %v920 = vld [vmem:[%s7 + $0x20] sm:$0xff]
  %v921 = vld [vmem:[%s7 + $0x28] sm:$0xff]
  %v922 = vld [vmem:[%s7 + $0x30] sm:$0xff]
  %v923 = vld [vmem:[%s7 + $0x38] sm:$0xff]
  %v924 = vld [vmem:[%s7 + $0x40] sm:$0xff]
  %v925 = vld [vmem:[%s7 + $0x48] sm:$0xff]
  %v926 = vld [vmem:[%s7 + $0x50] sm:$0xff]
  %v927 = vld [vmem:[%s7 + $0x58] sm:$0xff]
  %v928 = vld [vmem:[%s7 + $0x60] sm:$0xff]
  %v929 = vld [vmem:[%s7 + $0x68] sm:$0xff]
  %v930 = vld [vmem:[%s7 + $0x70] sm:$0xff]
  %v931 = vld [vmem:[%s7 + $0x78] sm:$0xff]
  %v932 = vld [vmem:[%s8] sm:$0x1]
  %v934 = vlaneseq
  %v935 = vshrl.u32 %v934, 7
  %v936 = vsub.s32 0, %v935
  %v937 = vrot.slane %v932, %v936
  %939 = vmatprep.subr.mxu0 0.0
  %940 = vmatpush1.msra.mxu0 %v931
  %941 = vmatprep.subr.mxu0 0.0
  %942 = vmatpush1.msra.mxu0 %v930
  %943 = vmatprep.subr.mxu0 0.0
  %944 = vmatpush1.msra.mxu0 %v929
  %945 = vmatprep.subr.mxu0 0.0
  %946 = vmatpush1.msra.mxu0 %v928
  %947 = vmatprep.subr.mxu0 0.0
  %948 = vmatpush1.msra.mxu0 %v927
  %949 = vmatprep.subr.mxu0 0.0
  %950 = vmatpush1.msra.mxu0 %v926
  %951 = vmatprep.subr.mxu0 0.0
  %952 = vmatpush1.msra.mxu0 %v925
  %953 = vmatprep.subr.mxu0 0.0
  %954 = vmatpush1.msra.mxu0 %v924
  %955 = vmatprep.subr.mxu0 0.0
  %956 = vmatpush1.msra.mxu0 %v923
  %957 = vmatprep.subr.mxu0 0.0
  %958 = vmatpush1.msra.mxu0 %v922
  %959 = vmatprep.subr.mxu0 0.0
  %960 = vmatpush1.msra.mxu0 %v921
  %961 = vmatprep.subr.mxu0 0.0
  %962 = vmatpush1.msra.mxu0 %v920
  %963 = vmatprep.subr.mxu0 0.0
  %964 = vmatpush1.msra.mxu0 %v919
  %965 = vmatprep.subr.mxu0 0.0
  %966 = vmatpush1.msra.mxu0 %v918
  %967 = vmatprep.subr.mxu0 0.0
  %968 = vmatpush1.msra.mxu0 %v917
  %969 = vmatprep.subr.mxu0 0.0
  %970 = vmatpush1.msra.mxu0 %v916
  %971 = vmatprep.subr.mxu0 0.0
  %972 = vmatpush2.msra.mxu0 0.0
  %973 = vmatprep.subr.mxu0 0.0
  %974 = vmatpush2.msra.mxu0 0.0
  %975 = vmatprep.subr.mxu0 0.0
  %976 = vmatpush2.msra.mxu0 0.0
  %977 = vmatprep.subr.mxu0 0.0
  %978 = vmatpush2.msra.mxu0 0.0
  %979 = vmatprep.subr.mxu0 0.0
  %980 = vmatpush2.msra.mxu0 0.0
  %981 = vmatprep.subr.mxu0 0.0
  %982 = vmatpush2.msra.mxu0 0.0
  %983 = vmatprep.subr.mxu0 0.0
  %984 = vmatpush2.msra.mxu0 0.0
  %985 = vmatprep.subr.mxu0 0.0
  %986 = vmatpush2.msra.mxu0 0.0
  %987 = vmatprep.subr.mxu0 0.0
  %988 = vmatpush2.msra.mxu0 0.0
  %989 = vmatprep.subr.mxu0 0.0
  %990 = vmatpush2.msra.mxu0 0.0
  %991 = vmatprep.subr.mxu0 0.0
  %992 = vmatpush2.msra.mxu0 0.0
  %993 = vmatprep.subr.mxu0 0.0
  %994 = vmatpush2.msra.mxu0 0.0
  %995 = vmatprep.subr.mxu0 0.0
  %996 = vmatpush2.msra.mxu0 0.0
  %997 = vmatprep.subr.mxu0 0.0
  %998 = vmatpush2.msra.mxu0 0.0
  %999 = vmatprep.subr.mxu0 0.0
  %1000 = vmatpush2.msra.mxu0 0.0
  %1001 = vmatprep.subr.mxu0 0.0
  %1002 = vmatpush2.msra.mxu0 0.0
  %1003 = vmatprep.mubr.f32.mxu0 0.0
  %1004 = vmatmul.mubr.f32.gmra.mxu0 %v884
  %v1005 = vpop.f32.mrf.mxu0
  %v1006 = vadd.f32 %v937, %v1005
  %v1007 = vpop.f32.mrf.mxu0
  %1008 = vmatprep.mubr.f32.mxu0 0.0
  %1009 = vmatmul.mubr.f32.gmra.mxu0 %v885
  %v1010 = vpop.f32.mrf.mxu0
  %v1011 = vadd.f32 %v937, %v1010
  %v1012 = vpop.f32.mrf.mxu0
  %1013 = vmatprep.mubr.f32.mxu0 0.0
  %1014 = vmatmul.mubr.f32.gmra.mxu0 %v886
  %v1015 = vpop.f32.mrf.mxu0
  %v1016 = vadd.f32 %v937, %v1015
  %v1017 = vpop.f32.mrf.mxu0
  %1018 = vmatprep.mubr.f32.mxu0 0.0
  %1019 = vmatmul.mubr.f32.gmra.mxu0 %v887
  %v1020 = vpop.f32.mrf.mxu0
  %v1021 = vadd.f32 %v937, %v1020
  %v1022 = vpop.f32.mrf.mxu0
  %1023 = vmatprep.mubr.f32.mxu0 0.0
  %1024 = vmatmul.mubr.f32.gmra.mxu0 %v888
  %v1025 = vpop.f32.mrf.mxu0
  %v1026 = vadd.f32 %v937, %v1025
  %v1027 = vpop.f32.mrf.mxu0
  %1028 = vmatprep.mubr.f32.mxu0 0.0
  %1029 = vmatmul.mubr.f32.gmra.mxu0 %v889
  %v1030 = vpop.f32.mrf.mxu0
  %v1031 = vadd.f32 %v937, %v1030
  %v1032 = vpop.f32.mrf.mxu0
  %1033 = vmatprep.mubr.f32.mxu0 0.0
  %1034 = vmatmul.mubr.f32.gmra.mxu0 %v890
  %v1035 = vpop.f32.mrf.mxu0
  %v1036 = vadd.f32 %v937, %v1035
  %v1037 = vpop.f32.mrf.mxu0
  %1038 = vmatprep.mubr.f32.mxu0 0.0
  %1039 = vmatmul.mubr.f32.gmra.mxu0 %v891
  %v1040 = vpop.f32.mrf.mxu0
  %v1041 = vadd.f32 %v937, %v1040
  %v1042 = vpop.f32.mrf.mxu0
  %1043 = vmatprep.mubr.f32.mxu0 0.0
  %1044 = vmatmul.mubr.f32.gmra.mxu0 %v892
  %v1045 = vpop.f32.mrf.mxu0
  %v1046 = vadd.f32 %v937, %v1045
  %v1047 = vpop.f32.mrf.mxu0
  %1048 = vmatprep.mubr.f32.mxu0 0.0
  %1049 = vmatmul.mubr.f32.gmra.mxu0 %v893
  %v1050 = vpop.f32.mrf.mxu0
  %v1051 = vadd.f32 %v937, %v1050
  %v1052 = vpop.f32.mrf.mxu0
  %1053 = vmatprep.mubr.f32.mxu0 0.0
  %1054 = vmatmul.mubr.f32.gmra.mxu0 %v894
  %v1055 = vpop.f32.mrf.mxu0
  %v1056 = vadd.f32 %v937, %v1055
  %v1057 = vpop.f32.mrf.mxu0
  %1058 = vmatprep.mubr.f32.mxu0 0.0
  %1059 = vmatmul.mubr.f32.gmra.mxu0 %v895
  %v1060 = vpop.f32.mrf.mxu0
  %v1061 = vadd.f32 %v937, %v1060
  %v1062 = vpop.f32.mrf.mxu0
  %1063 = vmatprep.mubr.f32.mxu0 0.0
  %1064 = vmatmul.mubr.f32.gmra.mxu0 %v896
  %v1065 = vpop.f32.mrf.mxu0
  %v1066 = vadd.f32 %v937, %v1065
  %v1067 = vpop.f32.mrf.mxu0
  %1068 = vmatprep.mubr.f32.mxu0 0.0
  %1069 = vmatmul.mubr.f32.gmra.mxu0 %v897
  %v1070 = vpop.f32.mrf.mxu0
  %v1071 = vadd.f32 %v937, %v1070
  %v1072 = vpop.f32.mrf.mxu0
  %1073 = vmatprep.mubr.f32.mxu0 0.0
  %1074 = vmatmul.mubr.f32.gmra.mxu0 %v898
  %v1075 = vpop.f32.mrf.mxu0
  %v1076 = vadd.f32 %v937, %v1075
  %v1077 = vpop.f32.mrf.mxu0
  %1078 = vmatprep.mubr.f32.mxu0 0.0
  %1079 = vmatmul.mubr.f32.gmra.mxu0 %v899
  %v1080 = vpop.f32.mrf.mxu0
  %v1081 = vadd.f32 %v937, %v1080
  %v1082 = vpop.f32.mrf.mxu0
  %1083 = vmatprep.mubr.f32.mxu0 0.0
  %1084 = vmatmul.mubr.f32.gmra.mxu0 %v900
  %v1085 = vpop.f32.mrf.mxu0
  %v1086 = vadd.f32 %v937, %v1085
  %v1087 = vpop.f32.mrf.mxu0
  %1088 = vmatprep.mubr.f32.mxu0 0.0
  %1089 = vmatmul.mubr.f32.gmra.mxu0 %v901
  %v1090 = vpop.f32.mrf.mxu0
  %v1091 = vadd.f32 %v937, %v1090
  %v1092 = vpop.f32.mrf.mxu0
  %1093 = vmatprep.mubr.f32.mxu0 0.0
  %1094 = vmatmul.mubr.f32.gmra.mxu0 %v902
  %v1095 = vpop.f32.mrf.mxu0
  %v1096 = vadd.f32 %v937, %v1095
  %v1097 = vpop.f32.mrf.mxu0
  %1098 = vmatprep.mubr.f32.mxu0 0.0
  %1099 = vmatmul.mubr.f32.gmra.mxu0 %v903
  %v1100 = vpop.f32.mrf.mxu0
  %v1101 = vadd.f32 %v937, %v1100
  %v1102 = vpop.f32.mrf.mxu0
  %1103 = vmatprep.mubr.f32.mxu0 0.0
  %1104 = vmatmul.mubr.f32.gmra.mxu0 %v904
  %v1105 = vpop.f32.mrf.mxu0
  %v1106 = vadd.f32 %v937, %v1105
  %v1107 = vpop.f32.mrf.mxu0
  %1108 = vmatprep.mubr.f32.mxu0 0.0
  %1109 = vmatmul.mubr.f32.gmra.mxu0 %v905
  %v1110 = vpop.f32.mrf.mxu0
  %v1111 = vadd.f32 %v937, %v1110
  %v1112 = vpop.f32.mrf.mxu0
  %1113 = vmatprep.mubr.f32.mxu0 0.0
  %1114 = vmatmul.mubr.f32.gmra.mxu0 %v906
  %v1115 = vpop.f32.mrf.mxu0
  %v1116 = vadd.f32 %v937, %v1115
  %v1117 = vpop.f32.mrf.mxu0
  %1118 = vmatprep.mubr.f32.mxu0 0.0
  %1119 = vmatmul.mubr.f32.gmra.mxu0 %v907
  %v1120 = vpop.f32.mrf.mxu0
  %v1121 = vadd.f32 %v937, %v1120
  %v1122 = vpop.f32.mrf.mxu0
  %1123 = vmatprep.mubr.f32.mxu0 0.0
  %1124 = vmatmul.mubr.f32.gmra.mxu0 %v908
  %v1125 = vpop.f32.mrf.mxu0
  %v1126 = vadd.f32 %v937, %v1125
  %v1127 = vpop.f32.mrf.mxu0
  %1128 = vmatprep.mubr.f32.mxu0 0.0
  %1129 = vmatmul.mubr.f32.gmra.mxu0 %v909
  %v1130 = vpop.f32.mrf.mxu0
  %v1131 = vadd.f32 %v937, %v1130
  %v1132 = vpop.f32.mrf.mxu0
  %1133 = vmatprep.mubr.f32.mxu0 0.0
  %1134 = vmatmul.mubr.f32.gmra.mxu0 %v910
  %v1135 = vpop.f32.mrf.mxu0
  %v1136 = vadd.f32 %v937, %v1135
  %v1137 = vpop.f32.mrf.mxu0
  %1138 = vmatprep.mubr.f32.mxu0 0.0
  %1139 = vmatmul.mubr.f32.gmra.mxu0 %v911
  %v1140 = vpop.f32.mrf.mxu0
  %v1141 = vadd.f32 %v937, %v1140
  %v1142 = vpop.f32.mrf.mxu0
  %1143 = vmatprep.mubr.f32.mxu0 0.0
  %1144 = vmatmul.mubr.f32.gmra.mxu0 %v912
  %v1145 = vpop.f32.mrf.mxu0
  %v1146 = vadd.f32 %v937, %v1145
  %v1147 = vpop.f32.mrf.mxu0
  %1148 = vmatprep.mubr.f32.mxu0 0.0
  %1149 = vmatmul.mubr.f32.gmra.mxu0 %v913
  %v1150 = vpop.f32.mrf.mxu0
  %v1151 = vadd.f32 %v937, %v1150
  %v1152 = vpop.f32.mrf.mxu0
  %1153 = vmatprep.mubr.f32.mxu0 0.0
  %1154 = vmatmul.mubr.f32.gmra.mxu0 %v914
  %v1155 = vpop.f32.mrf.mxu0
  %v1156 = vadd.f32 %v937, %v1155
  %v1157 = vpop.f32.mrf.mxu0
  %1158 = vmatprep.mubr.f32.mxu0 0.0
  %1159 = vmatmul.mubr.f32.gmra.mxu0 %v915
  %v1160 = vpop.f32.mrf.mxu0
  %v1161 = vadd.f32 %v937, %v1160
  %v1162 = vpop.f32.mrf.mxu0
  %1163 = vdwg.mxu0
  %v1164 = vmax.f32 %v1006, 0.0
  %v1165 = vmax.f32 %v1011, 0.0
  %v1166 = vmax.f32 %v1016, 0.0
  %v1167 = vmax.f32 %v1021, 0.0
  %v1168 = vmax.f32 %v1026, 0.0
  %v1169 = vmax.f32 %v1031, 0.0
  %v1170 = vmax.f32 %v1036, 0.0
  %v1171 = vmax.f32 %v1041, 0.0
  %v1172 = vmax.f32 %v1046, 0.0
  %v1173 = vmax.f32 %v1051, 0.0
  %v1174 = vmax.f32 %v1056, 0.0
  %v1175 = vmax.f32 %v1061, 0.0
  %v1176 = vmax.f32 %v1066, 0.0
  %v1177 = vmax.f32 %v1071, 0.0
  %v1178 = vmax.f32 %v1076, 0.0
  %v1179 = vmax.f32 %v1081, 0.0
  %v1180 = vmax.f32 %v1086, 0.0
  %v1181 = vmax.f32 %v1091, 0.0
  %v1182 = vmax.f32 %v1096, 0.0
  %v1183 = vmax.f32 %v1101, 0.0
  %v1184 = vmax.f32 %v1106, 0.0
  %v1185 = vmax.f32 %v1111, 0.0
  %v1186 = vmax.f32 %v1116, 0.0
  %v1187 = vmax.f32 %v1121, 0.0
  %v1188 = vmax.f32 %v1126, 0.0
  %v1189 = vmax.f32 %v1131, 0.0
  %v1190 = vmax.f32 %v1136, 0.0
  %v1191 = vmax.f32 %v1141, 0.0
  %v1192 = vmax.f32 %v1146, 0.0
  %v1193 = vmax.f32 %v1151, 0.0
  %v1194 = vmax.f32 %v1156, 0.0
  %v1195 = vmax.f32 %v1161, 0.0
  %v1196 = vld [vmem:[%s9] sm:$0xff]
  %v1197 = vld [vmem:[%s9 + $0x8] sm:$0xff]
  %v1198 = vld [vmem:[%s9 + $0x10] sm:$0xff]
  %v1199 = vld [vmem:[%s9 + $0x18] sm:$0xff]
  %v1200 = vld [vmem:[%s9 + $0x20] sm:$0xff]
  %v1201 = vld [vmem:[%s9 + $0x28] sm:$0xff]
  %v1202 = vld [vmem:[%s9 + $0x30] sm:$0xff]
  %v1203 = vld [vmem:[%s9 + $0x38] sm:$0xff]
  %v1204 = vld [vmem:[%s9 + $0x40] sm:$0xff]
  %v1205 = vld [vmem:[%s9 + $0x48] sm:$0xff]
  %v1206 = vld [vmem:[%s9 + $0x50] sm:$0xff]
  %v1207 = vld [vmem:[%s9 + $0x58] sm:$0xff]
  %v1208 = vld [vmem:[%s9 + $0x60] sm:$0xff]
  %v1209 = vld [vmem:[%s9 + $0x68] sm:$0xff]
  %v1210 = vld [vmem:[%s9 + $0x70] sm:$0xff]
  %v1211 = vld [vmem:[%s9 + $0x78] sm:$0xff]
  %v1212 = vld [vmem:[%s10] sm:$0x1]
  %v1214 = vlaneseq
  %v1215 = vshrl.u32 %v1214, 7
  %v1216 = vsub.s32 0, %v1215
  %v1217 = vrot.slane %v1212, %v1216
  %1219 = vmatprep.subr.mxu0 0.0
  %1220 = vmatpush1.msra.mxu0 %v1211
  %1221 = vmatprep.subr.mxu0 0.0
  %1222 = vmatpush1.msra.mxu0 %v1210
  %1223 = vmatprep.subr.mxu0 0.0
  %1224 = vmatpush1.msra.mxu0 %v1209
  %1225 = vmatprep.subr.mxu0 0.0
  %1226 = vmatpush1.msra.mxu0 %v1208
  %1227 = vmatprep.subr.mxu0 0.0
  %1228 = vmatpush1.msra.mxu0 %v1207
  %1229 = vmatprep.subr.mxu0 0.0
  %1230 = vmatpush1.msra.mxu0 %v1206
  %1231 = vmatprep.subr.mxu0 0.0
  %1232 = vmatpush1.msra.mxu0 %v1205
  %1233 = vmatprep.subr.mxu0 0.0
  %1234 = vmatpush1.msra.mxu0 %v1204
  %1235 = vmatprep.subr.mxu0 0.0
  %1236 = vmatpush1.msra.mxu0 %v1203
  %1237 = vmatprep.subr.mxu0 0.0
  %1238 = vmatpush1.msra.mxu0 %v1202
  %1239 = vmatprep.subr.mxu0 0.0
  %1240 = vmatpush1.msra.mxu0 %v1201
  %1241 = vmatprep.subr.mxu0 0.0
  %1242 = vmatpush1.msra.mxu0 %v1200
  %1243 = vmatprep.subr.mxu0 0.0
  %1244 = vmatpush1.msra.mxu0 %v1199
  %1245 = vmatprep.subr.mxu0 0.0
  %1246 = vmatpush1.msra.mxu0 %v1198
  %1247 = vmatprep.subr.mxu0 0.0
  %1248 = vmatpush1.msra.mxu0 %v1197
  %1249 = vmatprep.subr.mxu0 0.0
  %1250 = vmatpush1.msra.mxu0 %v1196
  %1251 = vmatprep.subr.mxu0 0.0
  %1252 = vmatpush2.msra.mxu0 0.0
  %1253 = vmatprep.subr.mxu0 0.0
  %1254 = vmatpush2.msra.mxu0 0.0
  %1255 = vmatprep.subr.mxu0 0.0
  %1256 = vmatpush2.msra.mxu0 0.0
  %1257 = vmatprep.subr.mxu0 0.0
  %1258 = vmatpush2.msra.mxu0 0.0
  %1259 = vmatprep.subr.mxu0 0.0
  %1260 = vmatpush2.msra.mxu0 0.0
  %1261 = vmatprep.subr.mxu0 0.0
  %1262 = vmatpush2.msra.mxu0 0.0
  %1263 = vmatprep.subr.mxu0 0.0
  %1264 = vmatpush2.msra.mxu0 0.0
  %1265 = vmatprep.subr.mxu0 0.0
  %1266 = vmatpush2.msra.mxu0 0.0
  %1267 = vmatprep.subr.mxu0 0.0
  %1268 = vmatpush2.msra.mxu0 0.0
  %1269 = vmatprep.subr.mxu0 0.0
  %1270 = vmatpush2.msra.mxu0 0.0
  %1271 = vmatprep.subr.mxu0 0.0
  %1272 = vmatpush2.msra.mxu0 0.0
  %1273 = vmatprep.subr.mxu0 0.0
  %1274 = vmatpush2.msra.mxu0 0.0
  %1275 = vmatprep.subr.mxu0 0.0
  %1276 = vmatpush2.msra.mxu0 0.0
  %1277 = vmatprep.subr.mxu0 0.0
  %1278 = vmatpush2.msra.mxu0 0.0
  %1279 = vmatprep.subr.mxu0 0.0
  %1280 = vmatpush2.msra.mxu0 0.0
  %1281 = vmatprep.subr.mxu0 0.0
  %1282 = vmatpush2.msra.mxu0 0.0
  %1283 = vmatprep.mubr.f32.mxu0 0.0
  %1284 = vmatmul.mubr.f32.gmra.mxu0 %v1164
  %v1285 = vpop.f32.mrf.mxu0
  %v1286 = vadd.f32 %v1217, %v1285
  %v1287 = vpop.f32.mrf.mxu0
  %1288 = vmatprep.mubr.f32.mxu0 0.0
  %1289 = vmatmul.mubr.f32.gmra.mxu0 %v1165
  %v1290 = vpop.f32.mrf.mxu0
  %v1291 = vadd.f32 %v1217, %v1290
  %v1292 = vpop.f32.mrf.mxu0
  %1293 = vmatprep.mubr.f32.mxu0 0.0
  %1294 = vmatmul.mubr.f32.gmra.mxu0 %v1166
  %v1295 = vpop.f32.mrf.mxu0
  %v1296 = vadd.f32 %v1217, %v1295
  %v1297 = vpop.f32.mrf.mxu0
  %1298 = vmatprep.mubr.f32.mxu0 0.0
  %1299 = vmatmul.mubr.f32.gmra.mxu0 %v1167
  %v1300 = vpop.f32.mrf.mxu0
  %v1301 = vadd.f32 %v1217, %v1300
  %v1302 = vpop.f32.mrf.mxu0
  %1303 = vmatprep.mubr.f32.mxu0 0.0
  %1304 = vmatmul.mubr.f32.gmra.mxu0 %v1168
  %v1305 = vpop.f32.mrf.mxu0
  %v1306 = vadd.f32 %v1217, %v1305
  %v1307 = vpop.f32.mrf.mxu0
  %1308 = vmatprep.mubr.f32.mxu0 0.0
  %1309 = vmatmul.mubr.f32.gmra.mxu0 %v1169
  %v1310 = vpop.f32.mrf.mxu0
  %v1311 = vadd.f32 %v1217, %v1310
  %v1312 = vpop.f32.mrf.mxu0
  %1313 = vmatprep.mubr.f32.mxu0 0.0
  %1314 = vmatmul.mubr.f32.gmra.mxu0 %v1170
  %v1315 = vpop.f32.mrf.mxu0
  %v1316 = vadd.f32 %v1217, %v1315
  %v1317 = vpop.f32.mrf.mxu0
  %1318 = vmatprep.mubr.f32.mxu0 0.0
  %1319 = vmatmul.mubr.f32.gmra.mxu0 %v1171
  %v1320 = vpop.f32.mrf.mxu0
  %v1321 = vadd.f32 %v1217, %v1320
  %v1322 = vpop.f32.mrf.mxu0
  %1323 = vmatprep.mubr.f32.mxu0 0.0
  %1324 = vmatmul.mubr.f32.gmra.mxu0 %v1172
  %v1325 = vpop.f32.mrf.mxu0
  %v1326 = vadd.f32 %v1217, %v1325
  %v1327 = vpop.f32.mrf.mxu0
  %1328 = vmatprep.mubr.f32.mxu0 0.0
  %1329 = vmatmul.mubr.f32.gmra.mxu0 %v1173
  %v1330 = vpop.f32.mrf.mxu0
  %v1331 = vadd.f32 %v1217, %v1330
  %v1332 = vpop.f32.mrf.mxu0
  %1333 = vmatprep.mubr.f32.mxu0 0.0
  %1334 = vmatmul.mubr.f32.gmra.mxu0 %v1174
  %v1335 = vpop.f32.mrf.mxu0
  %v1336 = vadd.f32 %v1217, %v1335
  %v1337 = vpop.f32.mrf.mxu0
  %1338 = vmatprep.mubr.f32.mxu0 0.0
  %1339 = vmatmul.mubr.f32.gmra.mxu0 %v1175
  %v1340 = vpop.f32.mrf.mxu0
  %v1341 = vadd.f32 %v1217, %v1340
  %v1342 = vpop.f32.mrf.mxu0
  %1343 = vmatprep.mubr.f32.mxu0 0.0
  %1344 = vmatmul.mubr.f32.gmra.mxu0 %v1176
  %v1345 = vpop.f32.mrf.mxu0
  %v1346 = vadd.f32 %v1217, %v1345
  %v1347 = vpop.f32.mrf.mxu0
  %1348 = vmatprep.mubr.f32.mxu0 0.0
  %1349 = vmatmul.mubr.f32.gmra.mxu0 %v1177
  %v1350 = vpop.f32.mrf.mxu0
  %v1351 = vadd.f32 %v1217, %v1350
  %v1352 = vpop.f32.mrf.mxu0
  %1353 = vmatprep.mubr.f32.mxu0 0.0
  %1354 = vmatmul.mubr.f32.gmra.mxu0 %v1178
  %v1355 = vpop.f32.mrf.mxu0
  %v1356 = vadd.f32 %v1217, %v1355
  %v1357 = vpop.f32.mrf.mxu0
  %1358 = vmatprep.mubr.f32.mxu0 0.0
  %1359 = vmatmul.mubr.f32.gmra.mxu0 %v1179
  %v1360 = vpop.f32.mrf.mxu0
  %v1361 = vadd.f32 %v1217, %v1360
  %v1362 = vpop.f32.mrf.mxu0
  %1363 = vmatprep.mubr.f32.mxu0 0.0
  %1364 = vmatmul.mubr.f32.gmra.mxu0 %v1180
  %v1365 = vpop.f32.mrf.mxu0
  %v1366 = vadd.f32 %v1217, %v1365
  %v1367 = vpop.f32.mrf.mxu0
  %1368 = vmatprep.mubr.f32.mxu0 0.0
  %1369 = vmatmul.mubr.f32.gmra.mxu0 %v1181
  %v1370 = vpop.f32.mrf.mxu0
  %v1371 = vadd.f32 %v1217, %v1370
  %v1372 = vpop.f32.mrf.mxu0
  %1373 = vmatprep.mubr.f32.mxu0 0.0
  %1374 = vmatmul.mubr.f32.gmra.mxu0 %v1182
  %v1375 = vpop.f32.mrf.mxu0
  %v1376 = vadd.f32 %v1217, %v1375
  %v1377 = vpop.f32.mrf.mxu0
  %1378 = vmatprep.mubr.f32.mxu0 0.0
  %1379 = vmatmul.mubr.f32.gmra.mxu0 %v1183
  %v1380 = vpop.f32.mrf.mxu0
  %v1381 = vadd.f32 %v1217, %v1380
  %v1382 = vpop.f32.mrf.mxu0
  %1383 = vmatprep.mubr.f32.mxu0 0.0
  %1384 = vmatmul.mubr.f32.gmra.mxu0 %v1184
  %v1385 = vpop.f32.mrf.mxu0
  %v1386 = vadd.f32 %v1217, %v1385
  %v1387 = vpop.f32.mrf.mxu0
  %1388 = vmatprep.mubr.f32.mxu0 0.0
  %1389 = vmatmul.mubr.f32.gmra.mxu0 %v1185
  %v1390 = vpop.f32.mrf.mxu0
  %v1391 = vadd.f32 %v1217, %v1390
  %v1392 = vpop.f32.mrf.mxu0
  %1393 = vmatprep.mubr.f32.mxu0 0.0
  %1394 = vmatmul.mubr.f32.gmra.mxu0 %v1186
  %v1395 = vpop.f32.mrf.mxu0
  %v1396 = vadd.f32 %v1217, %v1395
  %v1397 = vpop.f32.mrf.mxu0
  %1398 = vmatprep.mubr.f32.mxu0 0.0
  %1399 = vmatmul.mubr.f32.gmra.mxu0 %v1187
  %v1400 = vpop.f32.mrf.mxu0
  %v1401 = vadd.f32 %v1217, %v1400
  %v1402 = vpop.f32.mrf.mxu0
  %1403 = vmatprep.mubr.f32.mxu0 0.0
  %1404 = vmatmul.mubr.f32.gmra.mxu0 %v1188
  %v1405 = vpop.f32.mrf.mxu0
  %v1406 = vadd.f32 %v1217, %v1405
  %v1407 = vpop.f32.mrf.mxu0
  %1408 = vmatprep.mubr.f32.mxu0 0.0
  %1409 = vmatmul.mubr.f32.gmra.mxu0 %v1189
  %v1410 = vpop.f32.mrf.mxu0
  %v1411 = vadd.f32 %v1217, %v1410
  %v1412 = vpop.f32.mrf.mxu0
  %1413 = vmatprep.mubr.f32.mxu0 0.0
  %1414 = vmatmul.mubr.f32.gmra.mxu0 %v1190
  %v1415 = vpop.f32.mrf.mxu0
  %v1416 = vadd.f32 %v1217, %v1415
  %v1417 = vpop.f32.mrf.mxu0
  %1418 = vmatprep.mubr.f32.mxu0 0.0
  %1419 = vmatmul.mubr.f32.gmra.mxu0 %v1191
  %v1420 = vpop.f32.mrf.mxu0
  %v1421 = vadd.f32 %v1217, %v1420
  %v1422 = vpop.f32.mrf.mxu0
  %1423 = vmatprep.mubr.f32.mxu0 0.0
  %1424 = vmatmul.mubr.f32.gmra.mxu0 %v1192
  %v1425 = vpop.f32.mrf.mxu0
  %v1426 = vadd.f32 %v1217, %v1425
  %v1427 = vpop.f32.mrf.mxu0
  %1428 = vmatprep.mubr.f32.mxu0 0.0
  %1429 = vmatmul.mubr.f32.gmra.mxu0 %v1193
  %v1430 = vpop.f32.mrf.mxu0
  %v1431 = vadd.f32 %v1217, %v1430
  %v1432 = vpop.f32.mrf.mxu0
  %1433 = vmatprep.mubr.f32.mxu0 0.0
  %1434 = vmatmul.mubr.f32.gmra.mxu0 %v1194
  %v1435 = vpop.f32.mrf.mxu0
  %v1436 = vadd.f32 %v1217, %v1435
  %v1437 = vpop.f32.mrf.mxu0
  %1438 = vmatprep.mubr.f32.mxu0 0.0
  %1439 = vmatmul.mubr.f32.gmra.mxu0 %v1195
  %v1440 = vpop.f32.mrf.mxu0
  %v1441 = vadd.f32 %v1217, %v1440
  %v1442 = vpop.f32.mrf.mxu0
  %1443 = vdwg.mxu0
  %v1444 = vmax.f32 %v1286, 0.0
  %v1445 = vmax.f32 %v1291, 0.0
  %v1446 = vmax.f32 %v1296, 0.0
  %v1447 = vmax.f32 %v1301, 0.0
  %v1448 = vmax.f32 %v1306, 0.0
  %v1449 = vmax.f32 %v1311, 0.0
  %v1450 = vmax.f32 %v1316, 0.0
  %v1451 = vmax.f32 %v1321, 0.0
  %v1452 = vmax.f32 %v1326, 0.0
  %v1453 = vmax.f32 %v1331, 0.0
  %v1454 = vmax.f32 %v1336, 0.0
  %v1455 = vmax.f32 %v1341, 0.0
  %v1456 = vmax.f32 %v1346, 0.0
  %v1457 = vmax.f32 %v1351, 0.0
  %v1458 = vmax.f32 %v1356, 0.0
  %v1459 = vmax.f32 %v1361, 0.0
  %v1460 = vmax.f32 %v1366, 0.0
  %v1461 = vmax.f32 %v1371, 0.0
  %v1462 = vmax.f32 %v1376, 0.0
  %v1463 = vmax.f32 %v1381, 0.0
  %v1464 = vmax.f32 %v1386, 0.0
  %v1465 = vmax.f32 %v1391, 0.0
  %v1466 = vmax.f32 %v1396, 0.0
  %v1467 = vmax.f32 %v1401, 0.0
  %v1468 = vmax.f32 %v1406, 0.0
  %v1469 = vmax.f32 %v1411, 0.0
  %v1470 = vmax.f32 %v1416, 0.0
  %v1471 = vmax.f32 %v1421, 0.0
  %v1472 = vmax.f32 %v1426, 0.0
  %v1473 = vmax.f32 %v1431, 0.0
  %v1474 = vmax.f32 %v1436, 0.0
  %v1475 = vmax.f32 %v1441, 0.0
  %v1476 = vadd.f32 %v884, %v1444
  %v1477 = vadd.f32 %v885, %v1445
  %v1478 = vadd.f32 %v886, %v1446
  %v1479 = vadd.f32 %v887, %v1447
  %v1480 = vadd.f32 %v888, %v1448
  %v1481 = vadd.f32 %v889, %v1449
  %v1482 = vadd.f32 %v890, %v1450
  %v1483 = vadd.f32 %v891, %v1451
  %v1484 = vadd.f32 %v892, %v1452
  %v1485 = vadd.f32 %v893, %v1453
  %v1486 = vadd.f32 %v894, %v1454
  %v1487 = vadd.f32 %v895, %v1455
  %v1488 = vadd.f32 %v896, %v1456
  %v1489 = vadd.f32 %v897, %v1457
  %v1490 = vadd.f32 %v898, %v1458
  %v1491 = vadd.f32 %v899, %v1459
  %v1492 = vadd.f32 %v900, %v1460
  %v1493 = vadd.f32 %v901, %v1461
  %v1494 = vadd.f32 %v902, %v1462
  %v1495 = vadd.f32 %v903, %v1463
  %v1496 = vadd.f32 %v904, %v1464
  %v1497 = vadd.f32 %v905, %v1465
  %v1498 = vadd.f32 %v906, %v1466
  %v1499 = vadd.f32 %v907, %v1467
  %v1500 = vadd.f32 %v908, %v1468
  %v1501 = vadd.f32 %v909, %v1469
  %v1502 = vadd.f32 %v910, %v1470
  %v1503 = vadd.f32 %v911, %v1471
  %v1504 = vadd.f32 %v912, %v1472
  %v1505 = vadd.f32 %v913, %v1473
  %v1506 = vadd.f32 %v914, %v1474
  %v1507 = vadd.f32 %v915, %v1475
  %v1508 = vld [vmem:[%s11] sm:$0xff]
  %v1509 = vld [vmem:[%s11 + $0x8] sm:$0xff]
  %v1510 = vld [vmem:[%s11 + $0x10] sm:$0xff]
  %v1511 = vld [vmem:[%s11 + $0x18] sm:$0xff]
  %v1512 = vld [vmem:[%s11 + $0x20] sm:$0xff]
  %v1513 = vld [vmem:[%s11 + $0x28] sm:$0xff]
  %v1514 = vld [vmem:[%s11 + $0x30] sm:$0xff]
  %v1515 = vld [vmem:[%s11 + $0x38] sm:$0xff]
  %v1516 = vld [vmem:[%s11 + $0x40] sm:$0xff]
  %v1517 = vld [vmem:[%s11 + $0x48] sm:$0xff]
  %v1518 = vld [vmem:[%s11 + $0x50] sm:$0xff]
  %v1519 = vld [vmem:[%s11 + $0x58] sm:$0xff]
  %v1520 = vld [vmem:[%s11 + $0x60] sm:$0xff]
  %v1521 = vld [vmem:[%s11 + $0x68] sm:$0xff]
  %v1522 = vld [vmem:[%s11 + $0x70] sm:$0xff]
  %v1523 = vld [vmem:[%s11 + $0x78] sm:$0xff]
  %v1524 = vld [vmem:[%s12] sm:$0x1]
  %v1526 = vlaneseq
  %v1527 = vshrl.u32 %v1526, 7
  %v1528 = vsub.s32 0, %v1527
  %v1529 = vrot.slane %v1524, %v1528
  %1531 = vmatprep.subr.mxu0 0.0
  %1532 = vmatpush1.msra.mxu0 %v1523
  %1533 = vmatprep.subr.mxu0 0.0
  %1534 = vmatpush1.msra.mxu0 %v1522
  %1535 = vmatprep.subr.mxu0 0.0
  %1536 = vmatpush1.msra.mxu0 %v1521
  %1537 = vmatprep.subr.mxu0 0.0
  %1538 = vmatpush1.msra.mxu0 %v1520
  %1539 = vmatprep.subr.mxu0 0.0
  %1540 = vmatpush1.msra.mxu0 %v1519
  %1541 = vmatprep.subr.mxu0 0.0
  %1542 = vmatpush1.msra.mxu0 %v1518
  %1543 = vmatprep.subr.mxu0 0.0
  %1544 = vmatpush1.msra.mxu0 %v1517
  %1545 = vmatprep.subr.mxu0 0.0
  %1546 = vmatpush1.msra.mxu0 %v1516
  %1547 = vmatprep.subr.mxu0 0.0
  %1548 = vmatpush1.msra.mxu0 %v1515
  %1549 = vmatprep.subr.mxu0 0.0
  %1550 = vmatpush1.msra.mxu0 %v1514
  %1551 = vmatprep.subr.mxu0 0.0
  %1552 = vmatpush1.msra.mxu0 %v1513
  %1553 = vmatprep.subr.mxu0 0.0
  %1554 = vmatpush1.msra.mxu0 %v1512
  %1555 = vmatprep.subr.mxu0 0.0
  %1556 = vmatpush1.msra.mxu0 %v1511
  %1557 = vmatprep.subr.mxu0 0.0
  %1558 = vmatpush1.msra.mxu0 %v1510
  %1559 = vmatprep.subr.mxu0 0.0
  %1560 = vmatpush1.msra.mxu0 %v1509
  %1561 = vmatprep.subr.mxu0 0.0
  %1562 = vmatpush1.msra.mxu0 %v1508
  %1563 = vmatprep.subr.mxu0 0.0
  %1564 = vmatpush2.msra.mxu0 0.0
  %1565 = vmatprep.subr.mxu0 0.0
  %1566 = vmatpush2.msra.mxu0 0.0
  %1567 = vmatprep.subr.mxu0 0.0
  %1568 = vmatpush2.msra.mxu0 0.0
  %1569 = vmatprep.subr.mxu0 0.0
  %1570 = vmatpush2.msra.mxu0 0.0
  %1571 = vmatprep.subr.mxu0 0.0
  %1572 = vmatpush2.msra.mxu0 0.0
  %1573 = vmatprep.subr.mxu0 0.0
  %1574 = vmatpush2.msra.mxu0 0.0
  %1575 = vmatprep.subr.mxu0 0.0
  %1576 = vmatpush2.msra.mxu0 0.0
  %1577 = vmatprep.subr.mxu0 0.0
  %1578 = vmatpush2.msra.mxu0 0.0
  %1579 = vmatprep.subr.mxu0 0.0
  %1580 = vmatpush2.msra.mxu0 0.0
  %1581 = vmatprep.subr.mxu0 0.0
  %1582 = vmatpush2.msra.mxu0 0.0
  %1583 = vmatprep.subr.mxu0 0.0
  %1584 = vmatpush2.msra.mxu0 0.0
  %1585 = vmatprep.subr.mxu0 0.0
  %1586 = vmatpush2.msra.mxu0 0.0
  %1587 = vmatprep.subr.mxu0 0.0
  %1588 = vmatpush2.msra.mxu0 0.0
  %1589 = vmatprep.subr.mxu0 0.0
  %1590 = vmatpush2.msra.mxu0 0.0
  %1591 = vmatprep.subr.mxu0 0.0
  %1592 = vmatpush2.msra.mxu0 0.0
  %1593 = vmatprep.subr.mxu0 0.0
  %1594 = vmatpush2.msra.mxu0 0.0
  %1595 = vmatprep.mubr.f32.mxu0 0.0
  %1596 = vmatmul.mubr.f32.gmra.mxu0 %v1476
  %v1597 = vpop.f32.mrf.mxu0
  %v1598 = vadd.f32 %v1529, %v1597
  %v1599 = vpop.f32.mrf.mxu0
  %1600 = vmatprep.mubr.f32.mxu0 0.0
  %1601 = vmatmul.mubr.f32.gmra.mxu0 %v1477
  %v1602 = vpop.f32.mrf.mxu0
  %v1603 = vadd.f32 %v1529, %v1602
  %v1604 = vpop.f32.mrf.mxu0
  %1605 = vmatprep.mubr.f32.mxu0 0.0
  %1606 = vmatmul.mubr.f32.gmra.mxu0 %v1478
  %v1607 = vpop.f32.mrf.mxu0
  %v1608 = vadd.f32 %v1529, %v1607
  %v1609 = vpop.f32.mrf.mxu0
  %1610 = vmatprep.mubr.f32.mxu0 0.0
  %1611 = vmatmul.mubr.f32.gmra.mxu0 %v1479
  %v1612 = vpop.f32.mrf.mxu0
  %v1613 = vadd.f32 %v1529, %v1612
  %v1614 = vpop.f32.mrf.mxu0
  %1615 = vmatprep.mubr.f32.mxu0 0.0
  %1616 = vmatmul.mubr.f32.gmra.mxu0 %v1480
  %v1617 = vpop.f32.mrf.mxu0
  %v1618 = vadd.f32 %v1529, %v1617
  %v1619 = vpop.f32.mrf.mxu0
  %1620 = vmatprep.mubr.f32.mxu0 0.0
  %1621 = vmatmul.mubr.f32.gmra.mxu0 %v1481
  %v1622 = vpop.f32.mrf.mxu0
  %v1623 = vadd.f32 %v1529, %v1622
  %v1624 = vpop.f32.mrf.mxu0
  %1625 = vmatprep.mubr.f32.mxu0 0.0
  %1626 = vmatmul.mubr.f32.gmra.mxu0 %v1482
  %v1627 = vpop.f32.mrf.mxu0
  %v1628 = vadd.f32 %v1529, %v1627
  %v1629 = vpop.f32.mrf.mxu0
  %1630 = vmatprep.mubr.f32.mxu0 0.0
  %1631 = vmatmul.mubr.f32.gmra.mxu0 %v1483
  %v1632 = vpop.f32.mrf.mxu0
  %v1633 = vadd.f32 %v1529, %v1632
  %v1634 = vpop.f32.mrf.mxu0
  %1635 = vmatprep.mubr.f32.mxu0 0.0
  %1636 = vmatmul.mubr.f32.gmra.mxu0 %v1484
  %v1637 = vpop.f32.mrf.mxu0
  %v1638 = vadd.f32 %v1529, %v1637
  %v1639 = vpop.f32.mrf.mxu0
  %1640 = vmatprep.mubr.f32.mxu0 0.0
  %1641 = vmatmul.mubr.f32.gmra.mxu0 %v1485
  %v1642 = vpop.f32.mrf.mxu0
  %v1643 = vadd.f32 %v1529, %v1642
  %v1644 = vpop.f32.mrf.mxu0
  %1645 = vmatprep.mubr.f32.mxu0 0.0
  %1646 = vmatmul.mubr.f32.gmra.mxu0 %v1486
  %v1647 = vpop.f32.mrf.mxu0
  %v1648 = vadd.f32 %v1529, %v1647
  %v1649 = vpop.f32.mrf.mxu0
  %1650 = vmatprep.mubr.f32.mxu0 0.0
  %1651 = vmatmul.mubr.f32.gmra.mxu0 %v1487
  %v1652 = vpop.f32.mrf.mxu0
  %v1653 = vadd.f32 %v1529, %v1652
  %v1654 = vpop.f32.mrf.mxu0
  %1655 = vmatprep.mubr.f32.mxu0 0.0
  %1656 = vmatmul.mubr.f32.gmra.mxu0 %v1488
  %v1657 = vpop.f32.mrf.mxu0
  %v1658 = vadd.f32 %v1529, %v1657
  %v1659 = vpop.f32.mrf.mxu0
  %1660 = vmatprep.mubr.f32.mxu0 0.0
  %1661 = vmatmul.mubr.f32.gmra.mxu0 %v1489
  %v1662 = vpop.f32.mrf.mxu0
  %v1663 = vadd.f32 %v1529, %v1662
  %v1664 = vpop.f32.mrf.mxu0
  %1665 = vmatprep.mubr.f32.mxu0 0.0
  %1666 = vmatmul.mubr.f32.gmra.mxu0 %v1490
  %v1667 = vpop.f32.mrf.mxu0
  %v1668 = vadd.f32 %v1529, %v1667
  %v1669 = vpop.f32.mrf.mxu0
  %1670 = vmatprep.mubr.f32.mxu0 0.0
  %1671 = vmatmul.mubr.f32.gmra.mxu0 %v1491
  %v1672 = vpop.f32.mrf.mxu0
  %v1673 = vadd.f32 %v1529, %v1672
  %v1674 = vpop.f32.mrf.mxu0
  %1675 = vmatprep.mubr.f32.mxu0 0.0
  %1676 = vmatmul.mubr.f32.gmra.mxu0 %v1492
  %v1677 = vpop.f32.mrf.mxu0
  %v1678 = vadd.f32 %v1529, %v1677
  %v1679 = vpop.f32.mrf.mxu0
  %1680 = vmatprep.mubr.f32.mxu0 0.0
  %1681 = vmatmul.mubr.f32.gmra.mxu0 %v1493
  %v1682 = vpop.f32.mrf.mxu0
  %v1683 = vadd.f32 %v1529, %v1682
  %v1684 = vpop.f32.mrf.mxu0
  %1685 = vmatprep.mubr.f32.mxu0 0.0
  %1686 = vmatmul.mubr.f32.gmra.mxu0 %v1494
  %v1687 = vpop.f32.mrf.mxu0
  %v1688 = vadd.f32 %v1529, %v1687
  %v1689 = vpop.f32.mrf.mxu0
  %1690 = vmatprep.mubr.f32.mxu0 0.0
  %1691 = vmatmul.mubr.f32.gmra.mxu0 %v1495
  %v1692 = vpop.f32.mrf.mxu0
  %v1693 = vadd.f32 %v1529, %v1692
  %v1694 = vpop.f32.mrf.mxu0
  %1695 = vmatprep.mubr.f32.mxu0 0.0
  %1696 = vmatmul.mubr.f32.gmra.mxu0 %v1496
  %v1697 = vpop.f32.mrf.mxu0
  %v1698 = vadd.f32 %v1529, %v1697
  %v1699 = vpop.f32.mrf.mxu0
  %1700 = vmatprep.mubr.f32.mxu0 0.0
  %1701 = vmatmul.mubr.f32.gmra.mxu0 %v1497
  %v1702 = vpop.f32.mrf.mxu0
  %v1703 = vadd.f32 %v1529, %v1702
  %v1704 = vpop.f32.mrf.mxu0
  %1705 = vmatprep.mubr.f32.mxu0 0.0
  %1706 = vmatmul.mubr.f32.gmra.mxu0 %v1498
  %v1707 = vpop.f32.mrf.mxu0
  %v1708 = vadd.f32 %v1529, %v1707
  %v1709 = vpop.f32.mrf.mxu0
  %1710 = vmatprep.mubr.f32.mxu0 0.0
  %1711 = vmatmul.mubr.f32.gmra.mxu0 %v1499
  %v1712 = vpop.f32.mrf.mxu0
  %v1713 = vadd.f32 %v1529, %v1712
  %v1714 = vpop.f32.mrf.mxu0
  %1715 = vmatprep.mubr.f32.mxu0 0.0
  %1716 = vmatmul.mubr.f32.gmra.mxu0 %v1500
  %v1717 = vpop.f32.mrf.mxu0
  %v1718 = vadd.f32 %v1529, %v1717
  %v1719 = vpop.f32.mrf.mxu0
  %1720 = vmatprep.mubr.f32.mxu0 0.0
  %1721 = vmatmul.mubr.f32.gmra.mxu0 %v1501
  %v1722 = vpop.f32.mrf.mxu0
  %v1723 = vadd.f32 %v1529, %v1722
  %v1724 = vpop.f32.mrf.mxu0
  %1725 = vmatprep.mubr.f32.mxu0 0.0
  %1726 = vmatmul.mubr.f32.gmra.mxu0 %v1502
  %v1727 = vpop.f32.mrf.mxu0
  %v1728 = vadd.f32 %v1529, %v1727
  %v1729 = vpop.f32.mrf.mxu0
  %1730 = vmatprep.mubr.f32.mxu0 0.0
  %1731 = vmatmul.mubr.f32.gmra.mxu0 %v1503
  %v1732 = vpop.f32.mrf.mxu0
  %v1733 = vadd.f32 %v1529, %v1732
  %v1734 = vpop.f32.mrf.mxu0
  %1735 = vmatprep.mubr.f32.mxu0 0.0
  %1736 = vmatmul.mubr.f32.gmra.mxu0 %v1504
  %v1737 = vpop.f32.mrf.mxu0
  %v1738 = vadd.f32 %v1529, %v1737
  %v1739 = vpop.f32.mrf.mxu0
  %1740 = vmatprep.mubr.f32.mxu0 0.0
  %1741 = vmatmul.mubr.f32.gmra.mxu0 %v1505
  %v1742 = vpop.f32.mrf.mxu0
  %v1743 = vadd.f32 %v1529, %v1742
  %v1744 = vpop.f32.mrf.mxu0
  %1745 = vmatprep.mubr.f32.mxu0 0.0
  %1746 = vmatmul.mubr.f32.gmra.mxu0 %v1506
  %v1747 = vpop.f32.mrf.mxu0
  %v1748 = vadd.f32 %v1529, %v1747
  %v1749 = vpop.f32.mrf.mxu0
  %1750 = vmatprep.mubr.f32.mxu0 0.0
  %1751 = vmatmul.mubr.f32.gmra.mxu0 %v1507
  %v1752 = vpop.f32.mrf.mxu0
  %v1753 = vadd.f32 %v1529, %v1752
  %v1754 = vpop.f32.mrf.mxu0
  %1755 = vdwg.mxu0
  %1756 = vst [vmem:[%s13] sm:$0xff] %v1598
  %1757 = vst [vmem:[%s13 + $0x8] sm:$0xff] %v1603
  %1758 = vst [vmem:[%s13 + $0x10] sm:$0xff] %v1608
  %1759 = vst [vmem:[%s13 + $0x18] sm:$0xff] %v1613
  %1760 = vst [vmem:[%s13 + $0x20] sm:$0xff] %v1618
  %1761 = vst [vmem:[%s13 + $0x28] sm:$0xff] %v1623
  %1762 = vst [vmem:[%s13 + $0x30] sm:$0xff] %v1628
  %1763 = vst [vmem:[%s13 + $0x38] sm:$0xff] %v1633
  %1764 = vst [vmem:[%s13 + $0x40] sm:$0xff] %v1638
  %1765 = vst [vmem:[%s13 + $0x48] sm:$0xff] %v1643
  %1766 = vst [vmem:[%s13 + $0x50] sm:$0xff] %v1648
  %1767 = vst [vmem:[%s13 + $0x58] sm:$0xff] %v1653
  %1768 = vst [vmem:[%s13 + $0x60] sm:$0xff] %v1658
  %1769 = vst [vmem:[%s13 + $0x68] sm:$0xff] %v1663
  %1770 = vst [vmem:[%s13 + $0x70] sm:$0xff] %v1668
  %1771 = vst [vmem:[%s13 + $0x78] sm:$0xff] %v1673
  %1772 = vst [vmem:[%s13 + $0x80] sm:$0xff] %v1678
  %1773 = vst [vmem:[%s13 + $0x88] sm:$0xff] %v1683
  %1774 = vst [vmem:[%s13 + $0x90] sm:$0xff] %v1688
  %1775 = vst [vmem:[%s13 + $0x98] sm:$0xff] %v1693
  %1776 = vst [vmem:[%s13 + $0xa0] sm:$0xff] %v1698
  %1777 = vst [vmem:[%s13 + $0xa8] sm:$0xff] %v1703
  %1778 = vst [vmem:[%s13 + $0xb0] sm:$0xff] %v1708
  %1779 = vst [vmem:[%s13 + $0xb8] sm:$0xff] %v1713
  %1780 = vst [vmem:[%s13 + $0xc0] sm:$0xff] %v1718
  %1781 = vst [vmem:[%s13 + $0xc8] sm:$0xff] %v1723
  %1782 = vst [vmem:[%s13 + $0xd0] sm:$0xff] %v1728
  %1783 = vst [vmem:[%s13 + $0xd8] sm:$0xff] %v1733
  %1784 = vst [vmem:[%s13 + $0xe0] sm:$0xff] %v1738
  %1785 = vst [vmem:[%s13 + $0xe8] sm:$0xff] %v1743
  %1786 = vst [vmem:[%s13 + $0xf0] sm:$0xff] %v1748
  %1787 = vst [vmem:[%s13 + $0xf8] sm:$0xff] %v1753
  // Predicated region
  $region54: #{word_mlp.1} parent=0 // pred_check
    _
  $region55: #{word_mlp.1} parent=0 // pred_check_branch
    %1789 = sbr.rel (0) target = $region57
  $region56: #{word_mlp.1} parent=0 // pred_region
    _
  $region57: #{word_mlp.1} parent=0 // pred_fallthru
    _
  // Predicated region
  $region58: #{word_mlp.1} parent=0 // pred_check
    _
  $region59: #{word_mlp.1} parent=0 // pred_check_branch
    %1791 = sbr.rel (0) target = $region61
  $region60: #{word_mlp.1} parent=0 // pred_region
    _
  $region61: #{word_mlp.1} parent=0 // pred_fallthru
    _

</llo_original>
